<compile_context>
chip_gen: v5e
topology: v5e:2x2
jax: 0.10.0
libtpu: 0.0.40
codegen_flags: <defaults>
</compile_context>

<pallas_src>
import functools

import jax
import jax.numpy as jnp
from jax.experimental import pallas as pl
from jax.experimental.pallas import tpu as pltpu

LOG_STD_MAX = 0.0
LOG_STD_MIN = -20.0

LANE = 128      # vreg lane width
SUBLANE = 8     # vreg sublane count (f32)


def _encoder_kernel(
    x_ref,        # (T*Bp, D_in)   time-major, flattened, batch padded to Bp
    we_ref,       # (D_in, H)      embed_a weight (transposed)
    be_ref,       # (1, H)         embed_a bias
    wih_ref,      # (H, 4H)        lstm weight_ih_l0 (transposed)
    whh_ref,      # (H, 4H)        lstm weight_hh_l0 (transposed)
    bg_ref,       # (1, 4H)        b_ih + b_hh (pre-summed in wrapper)
    wh_ref,       # (H, HIDP)      hidden linear (transposed, out dim padded to 128)
    bh_ref,       # (1, HIDP)
    wmu_ref,      # (HIDP, Zp)
    bmu_ref,      # (1, Zp)
    wls_ref,      # (HIDP, Zp)
    bls_ref,      # (1, Zp)
    eps_ref,      # (Bp, Zp)       standard-normal noise for rsample
    sample_ref,   # out (Bp, Zp)
    mu_ref,       # out (Bp, Zp)
    std_ref,      # out (Bp, Zp)
    g_scratch,    # VMEM (T*Bp, 4H) f32
    *,
    seq_len: int,
    batch_pad: int,
    hidden_dim: int,
):
    T, Bp, H = seq_len, batch_pad, hidden_dim

    # ---- Hoisted input projections: two large matmuls, biases folded in once ----
    e_all = jnp.dot(x_ref[...], we_ref[...], preferred_element_type=jnp.float32) + be_ref[...]
    g_scratch[...] = (
        jnp.dot(e_all, wih_ref[...], preferred_element_type=jnp.float32) + bg_ref[...]
    )

    whh = whh_ref[...]
    h = jnp.zeros((Bp, H), jnp.float32)
    c = jnp.zeros((Bp, H), jnp.float32)

    # ---- Recurrence: fully unrolled; only h @ W_hh on the loop-carried path.
    #      Gate slices are 128-lane aligned because H is a multiple of 128. ----
    for t in range(T):
        g_in = g_scratch[t * Bp:(t + 1) * Bp, :]                        # (Bp, 4H) aligned slice
        gates = g_in + jnp.dot(h, whh, preferred_element_type=jnp.float32)
        i_g = jax.nn.sigmoid(gates[:, 0 * H:1 * H])   # PyTorch gate order: i, f, g, o
        f_g = jax.nn.sigmoid(gates[:, 1 * H:2 * H])
        g_g = jnp.tanh(gates[:, 2 * H:3 * H])
        o_g = jax.nn.sigmoid(gates[:, 3 * H:4 * H])
        c = f_g * c + i_g * g_g
        h = o_g * jnp.tanh(c)

    # ---- Heads (all lane-dense: HIDP = Zp = 128) ----
    hid = jnp.maximum(
        jnp.dot(h, wh_ref[...], preferred_element_type=jnp.float32) + bh_ref[...], 0.0)
    mu = jnp.dot(hid, wmu_ref[...], preferred_element_type=jnp.float32) + bmu_ref[...]
    log_std = jnp.dot(hid, wls_ref[...], preferred_element_type=jnp.float32) + bls_ref[...]
    std = jnp.exp(jnp.clip(log_std, LOG_STD_MIN, LOG_STD_MAX))
    sample = mu + std * eps_ref[...]                  # Normal(mu, std).rsample()

    sample_ref[...] = sample
    mu_ref[...] = mu
    std_ref[...] = std


def _round_up(x, m):
    return ((x + m - 1) // m) * m


def _pad_to(a, shape):
    pads = [(0, s - d) for d, s in zip(a.shape, shape)]
    return jnp.pad(a, pads)


def encoder_forward(x_btd, params, eps):
    """x_btd: (B, T, D_in) float32 (PyTorch batch_first convention). Returns (sample, mu, std)."""
    B, T, D_in = x_btd.shape
    H = params["we"].shape[1]
    Z = params["wmu"].shape[1]
    hid_dim = params["wh"].shape[1]

    assert H % LANE == 0, "hidden_dim must be a multiple of 128 for lane-aligned gate slices"

    Bp = _round_up(max(B, SUBLANE), SUBLANE)     # pad batch to full sublanes
    Zp = _round_up(max(Z, LANE), LANE)           # lane-dense outputs
    HIDP = _round_up(max(hid_dim, LANE), LANE)   # lane-dense hidden head

    # Pad batch, go time-major, flatten. Tiny at these sizes; for long sequences this
    # transpose would be folded into the kernel (e.g. a T-grid BlockSpec index_map).
    x_p = _pad_to(x_btd.astype(jnp.float32), (Bp, T, D_in))
    x_tm = jnp.transpose(x_p, (1, 0, 2)).reshape(T * Bp, D_in)
    eps_p = _pad_to(eps.astype(jnp.float32), (Bp, Zp))

    bg = params["bih"] + params["bhh"]            # fold the two LSTM biases once, outside the kernel

    wh_p = _pad_to(params["wh"], (H, HIDP))
    bh_p = _pad_to(params["bh"], (1, HIDP))
    wmu_p = _pad_to(params["wmu"], (HIDP, Zp))
    bmu_p = _pad_to(params["bmu"], (1, Zp))
    wls_p = _pad_to(params["wls"], (HIDP, Zp))
    bls_p = _pad_to(params["bls"], (1, Zp))

    vmem = pl.BlockSpec(memory_space=pltpu.MemorySpace.VMEM)
    n_inputs = 13

    out_shapes = (
        jax.ShapeDtypeStruct((Bp, Zp), jnp.float32),   # sample
        jax.ShapeDtypeStruct((Bp, Zp), jnp.float32),   # mu
        jax.ShapeDtypeStruct((Bp, Zp), jnp.float32),   # std
    )

    kernel = functools.partial(_encoder_kernel, seq_len=T, batch_pad=Bp, hidden_dim=H)
    sample, mu, std = pl.pallas_call(
        kernel,
        out_shape=out_shapes,
        in_specs=[vmem] * n_inputs,
        out_specs=(vmem, vmem, vmem),
        scratch_shapes=[pltpu.VMEM((T * Bp, 4 * H), jnp.float32)],
    )(
        x_tm,
        params["we"], params["be"],
        params["wih"], params["whh"], bg,
        wh_p, bh_p, wmu_p, bmu_p, wls_p, bls_p,
        eps_p,
    )
    # TODO(synk): torch.distributions.Normal has no Pallas equivalent; the distribution
    # is fully characterized by (mu, std) which are returned alongside the rsample.
    return sample[:B, :Z], mu[:B, :Z], std[:B, :Z]


def _encoder_reference(x_btd, params, eps):
    """Pure-JAX reference mirroring the PyTorch forward (for correctness check)."""
    B, T, D_in = x_btd.shape
    H = params["we"].shape[1]
    e = jnp.einsum("btd,dh->bth", x_btd, params["we"]) + params["be"]
    h = jnp.zeros((B, H), jnp.float32)
    c = jnp.zeros((B, H), jnp.float32)
    for t in range(T):
        gates = e[:, t, :] @ params["wih"] + params["bih"] + h @ params["whh"] + params["bhh"]
        i_g = jax.nn.sigmoid(gates[:, 0 * H:1 * H])
        f_g = jax.nn.sigmoid(gates[:, 1 * H:2 * H])
        g_g = jnp.tanh(gates[:, 2 * H:3 * H])
        o_g = jax.nn.sigmoid(gates[:, 3 * H:4 * H])
        c = f_g * c + i_g * g_g
        h = o_g * jnp.tanh(c)
    hid = jnp.maximum(h @ params["wh"] + params["bh"], 0.0)
    mu = hid @ params["wmu"] + params["bmu"]
    log_std = hid @ params["wls"] + params["bls"]
    std = jnp.exp(jnp.clip(log_std, LOG_STD_MIN, LOG_STD_MAX))
    return mu + std * eps, mu, std


def init_params(key, input_dim, hidden_dim, z_dim):
    ks = jax.random.split(key, 12)
    s = 0.1
    return {
        # stored as (in_features, out_features), i.e. PyTorch weights pre-transposed
        "we":  s * jax.random.normal(ks[0], (input_dim, hidden_dim), jnp.float32),
        "be":  s * jax.random.normal(ks[1], (1, hidden_dim), jnp.float32),
        "wih": s * jax.random.normal(ks[2], (hidden_dim, 4 * hidden_dim), jnp.float32),
        "whh": s * jax.random.normal(ks[3], (hidden_dim, 4 * hidden_dim), jnp.float32),
        "bih": s * jax.random.normal(ks[4], (1, 4 * hidden_dim), jnp.float32),
        "bhh": s * jax.random.normal(ks[5], (1, 4 * hidden_dim), jnp.float32),
        "wh":  s * jax.random.normal(ks[6], (hidden_dim, 64), jnp.float32),
        "bh":  s * jax.random.normal(ks[7], (1, 64), jnp.float32),
        "wmu": s * jax.random.normal(ks[8], (64, z_dim), jnp.float32),
        "bmu": s * jax.random.normal(ks[9], (1, z_dim), jnp.float32),
        "wls": s * jax.random.normal(ks[10], (64, z_dim), jnp.float32),
        "bls": s * jax.random.normal(ks[11], (1, z_dim), jnp.float32),
    }


if __name__ == "__main__":
    B, T, D_IN = 2, 8, 4
    HIDDEN, Z_DIM = 128, 8    # HIDDEN = module default (128) -> lane-aligned gate slices

    root = jax.random.PRNGKey(0)
    k_x, k_p, k_eps = jax.random.split(root, 3)

    x = jax.random.normal(k_x, (B, T, D_IN), jnp.float32)
    params = init_params(k_p, D_IN, HIDDEN, Z_DIM)
    eps = jax.random.normal(k_eps, (B, Z_DIM), jnp.float32)

    sample, mu, std = encoder_forward(x, params, eps)
    jax.block_until_ready((sample, mu, std))

    r_sample, r_mu, r_std = _encoder_reference(x, params, eps)
    assert sample.shape == (B, Z_DIM) and mu.shape == (B, Z_DIM) and std.shape == (B, Z_DIM)
    assert jnp.allclose(mu, r_mu, atol=2e-2, rtol=2e-2)
    assert jnp.allclose(std, r_std, atol=2e-2, rtol=2e-2)
    assert jnp.allclose(sample, r_sample, atol=2e-2, rtol=2e-2)

    print("KERNEL_OK")
</pallas_src>

<mosaic_0001>
module attributes {stable_mosaic.version = 11 : i64} {
  func.func @_encoder_kernel(%arg0: memref<64x4xf32, #tpu.memory_space<vmem>>, %arg1: memref<4x128xf32, #tpu.memory_space<vmem>>, %arg2: memref<1x128xf32, #tpu.memory_space<vmem>>, %arg3: memref<128x512xf32, #tpu.memory_space<vmem>>, %arg4: memref<128x512xf32, #tpu.memory_space<vmem>>, %arg5: memref<1x512xf32, #tpu.memory_space<vmem>>, %arg6: memref<128x128xf32, #tpu.memory_space<vmem>>, %arg7: memref<1x128xf32, #tpu.memory_space<vmem>>, %arg8: memref<128x128xf32, #tpu.memory_space<vmem>>, %arg9: memref<1x128xf32, #tpu.memory_space<vmem>>, %arg10: memref<128x128xf32, #tpu.memory_space<vmem>>, %arg11: memref<1x128xf32, #tpu.memory_space<vmem>>, %arg12: memref<8x128xf32, #tpu.memory_space<vmem>>, %arg13: memref<8x128xf32, #tpu.memory_space<vmem>>, %arg14: memref<8x128xf32, #tpu.memory_space<vmem>>, %arg15: memref<8x128xf32, #tpu.memory_space<vmem>>, %arg16: memref<64x512xf32, #tpu.memory_space<vmem>>) attributes {dimension_semantics = [], scalar_prefetch = 0 : i64, scratch_operands = 1 : i64, tpu.core_type = #tpu.core_type<tc>} {
    %c0 = arith.constant 0 : index
    %c0_0 = arith.constant 0 : index
    %0 = vector.load %arg0[%c0, %c0_0] : memref<64x4xf32, #tpu.memory_space<vmem>>, vector<64x4xf32>
    %c0_1 = arith.constant 0 : index
    %c0_2 = arith.constant 0 : index
    %1 = vector.load %arg1[%c0_1, %c0_2] : memref<4x128xf32, #tpu.memory_space<vmem>>, vector<4x128xf32>
    %cst = arith.constant dense<0.000000e+00> : vector<64x128xf32>
    %2 = tpu.matmul %0, %1, %cst {dimension_numbers = #tpu.dot_dimension_numbers<[1], [0], [0], [1], [0, 0, 1, 1], [], []>} : vector<64x4xf32>, vector<4x128xf32>, vector<64x128xf32> -> vector<64x128xf32>
    %c0_3 = arith.constant 0 : index
    %c0_4 = arith.constant 0 : index
    %3 = vector.load %arg2[%c0_3, %c0_4] : memref<1x128xf32, #tpu.memory_space<vmem>>, vector<1x128xf32>
    %4 = vector.broadcast %3 : vector<1x128xf32> to vector<64x128xf32>
    %5 = arith.addf %2, %4 : vector<64x128xf32>
    %c0_5 = arith.constant 0 : index
    %c0_6 = arith.constant 0 : index
    %6 = vector.load %arg3[%c0_5, %c0_6] : memref<128x512xf32, #tpu.memory_space<vmem>>, vector<128x512xf32>
    %cst_7 = arith.constant dense<0.000000e+00> : vector<64x512xf32>
    %7 = tpu.matmul %5, %6, %cst_7 {dimension_numbers = #tpu.dot_dimension_numbers<[1], [0], [0], [1], [0, 0, 1, 1], [], []>} : vector<64x128xf32>, vector<128x512xf32>, vector<64x512xf32> -> vector<64x512xf32>
    %c0_8 = arith.constant 0 : index
    %c0_9 = arith.constant 0 : index
    %8 = vector.load %arg5[%c0_8, %c0_9] : memref<1x512xf32, #tpu.memory_space<vmem>>, vector<1x512xf32>
    %9 = vector.broadcast %8 : vector<1x512xf32> to vector<64x512xf32>
    %10 = arith.addf %7, %9 : vector<64x512xf32>
    %c0_10 = arith.constant 0 : index
    %c0_11 = arith.constant 0 : index
    %11 = vector.load %arg16[%c0_10, %c0_11] : memref<64x512xf32, #tpu.memory_space<vmem>>, vector<64x512xf32>
    tpu.vector_store %arg16[%c0_10, %c0_11], %10 {strides = array<i32>} : memref<64x512xf32, #tpu.memory_space<vmem>>, vector<64x512xf32>,
    %c0_12 = arith.constant 0 : index
    %c0_13 = arith.constant 0 : index
    %12 = vector.load %arg4[%c0_12, %c0_13] : memref<128x512xf32, #tpu.memory_space<vmem>>, vector<128x512xf32>
    %cst_14 = arith.constant 0.000000e+00 : f32
    %13 = vector.broadcast %cst_14 : f32 to vector<8x128xf32>
    %cst_15 = arith.constant 0.000000e+00 : f32
    %14 = vector.broadcast %cst_15 : f32 to vector<8x128xf32>
    %c0_16 = arith.constant 0 : index
    %c0_17 = arith.constant 0 : index
    %15 = vector.load %arg16[%c0_16, %c0_17] : memref<64x512xf32, #tpu.memory_space<vmem>>, vector<8x512xf32>
    %cst_18 = arith.constant dense<0.000000e+00> : vector<8x512xf32>
    %16 = tpu.matmul %13, %12, %cst_18 {dimension_numbers = #tpu.dot_dimension_numbers<[1], [0], [0], [1], [0, 0, 1, 1], [], []>} : vector<8x128xf32>, vector<128x512xf32>, vector<8x512xf32> -> vector<8x512xf32>
    %17 = arith.addf %15, %16 : vector<8x512xf32>
    %18 = vector.extract_strided_slice %17 {offsets = [0, 0], sizes = [8, 128], strides = [1, 1]} : vector<8x512xf32> to vector<8x128xf32>
    %19 = arith.negf %18 : vector<8x128xf32>
    %20 = math.exp %19 : vector<8x128xf32>
    %cst_19 = arith.constant 1.000000e+00 : f32
    %21 = vector.broadcast %cst_19 : f32 to vector<8x128xf32>
    %22 = arith.addf %21, %20 : vector<8x128xf32>
    %23 = arith.divf %21, %22 : vector<8x128xf32>
    %24 = vector.extract_strided_slice %17 {offsets = [0, 128], sizes = [8, 128], strides = [1, 1]} : vector<8x512xf32> to vector<8x128xf32>
    %25 = arith.negf %24 : vector<8x128xf32>
    %26 = math.exp %25 : vector<8x128xf32>
    %cst_20 = arith.constant 1.000000e+00 : f32
    %27 = vector.broadcast %cst_20 : f32 to vector<8x128xf32>
    %28 = arith.addf %27, %26 : vector<8x128xf32>
    %29 = arith.divf %27, %28 : vector<8x128xf32>
    %30 = vector.extract_strided_slice %17 {offsets = [0, 256], sizes = [8, 128], strides = [1, 1]} : vector<8x512xf32> to vector<8x128xf32>
    %31 = math.tanh %30 : vector<8x128xf32>
    %32 = vector.extract_strided_slice %17 {offsets = [0, 384], sizes = [8, 128], strides = [1, 1]} : vector<8x512xf32> to vector<8x128xf32>
    %33 = arith.negf %32 : vector<8x128xf32>
    %34 = math.exp %33 : vector<8x128xf32>
    %cst_21 = arith.constant 1.000000e+00 : f32
    %35 = vector.broadcast %cst_21 : f32 to vector<8x128xf32>
    %36 = arith.addf %35, %34 : vector<8x128xf32>
    %37 = arith.divf %35, %36 : vector<8x128xf32>
    %38 = arith.mulf %29, %14 : vector<8x128xf32>
    %39 = arith.mulf %23, %31 : vector<8x128xf32>
    %40 = arith.addf %38, %39 : vector<8x128xf32>
    %41 = math.tanh %40 : vector<8x128xf32>
    %42 = arith.mulf %37, %41 : vector<8x128xf32>
    %c8 = arith.constant 8 : index
    %c0_22 = arith.constant 0 : index
    %43 = vector.load %arg16[%c8, %c0_22] : memref<64x512xf32, #tpu.memory_space<vmem>>, vector<8x512xf32>
    %cst_23 = arith.constant dense<0.000000e+00> : vector<8x512xf32>
    %44 = tpu.matmul %42, %12, %cst_23 {dimension_numbers = #tpu.dot_dimension_numbers<[1], [0], [0], [1], [0, 0, 1, 1], [], []>} : vector<8x128xf32>, vector<128x512xf32>, vector<8x512xf32> -> vector<8x512xf32>
    %45 = arith.addf %43, %44 : vector<8x512xf32>
    %46 = vector.extract_strided_slice %45 {offsets = [0, 0], sizes = [8, 128], strides = [1, 1]} : vector<8x512xf32> to vector<8x128xf32>
    %47 = arith.negf %46 : vector<8x128xf32>
    %48 = math.exp %47 : vector<8x128xf32>
    %cst_24 = arith.constant 1.000000e+00 : f32
    %49 = vector.broadcast %cst_24 : f32 to vector<8x128xf32>
    %50 = arith.addf %49, %48 : vector<8x128xf32>
    %51 = arith.divf %49, %50 : vector<8x128xf32>
    %52 = vector.extract_strided_slice %45 {offsets = [0, 128], sizes = [8, 128], strides = [1, 1]} : vector<8x512xf32> to vector<8x128xf32>
    %53 = arith.negf %52 : vector<8x128xf32>
    %54 = math.exp %53 : vector<8x128xf32>
    %cst_25 = arith.constant 1.000000e+00 : f32
    %55 = vector.broadcast %cst_25 : f32 to vector<8x128xf32>
    %56 = arith.addf %55, %54 : vector<8x128xf32>
    %57 = arith.divf %55, %56 : vector<8x128xf32>
    %58 = vector.extract_strided_slice %45 {offsets = [0, 256], sizes = [8, 128], strides = [1, 1]} : vector<8x512xf32> to vector<8x128xf32>
    %59 = math.tanh %58 : vector<8x128xf32>
    %60 = vector.extract_strided_slice %45 {offsets = [0, 384], sizes = [8, 128], strides = [1, 1]} : vector<8x512xf32> to vector<8x128xf32>
    %61 = arith.negf %60 : vector<8x128xf32>
    %62 = math.exp %61 : vector<8x128xf32>
    %cst_26 = arith.constant 1.000000e+00 : f32
    %63 = vector.broadcast %cst_26 : f32 to vector<8x128xf32>
    %64 = arith.addf %63, %62 : vector<8x128xf32>
    %65 = arith.divf %63, %64 : vector<8x128xf32>
    %66 = arith.mulf %57, %40 : vector<8x128xf32>
    %67 = arith.mulf %51, %59 : vector<8x128xf32>
    %68 = arith.addf %66, %67 : vector<8x128xf32>
    %69 = math.tanh %68 : vector<8x128xf32>
    %70 = arith.mulf %65, %69 : vector<8x128xf32>
    %c16 = arith.constant 16 : index
    %c0_27 = arith.constant 0 : index
    %71 = vector.load %arg16[%c16, %c0_27] : memref<64x512xf32, #tpu.memory_space<vmem>>, vector<8x512xf32>
    %cst_28 = arith.constant dense<0.000000e+00> : vector<8x512xf32>
    %72 = tpu.matmul %70, %12, %cst_28 {dimension_numbers = #tpu.dot_dimension_numbers<[1], [0], [0], [1], [0, 0, 1, 1], [], []>} : vector<8x128xf32>, vector<128x512xf32>, vector<8x512xf32> -> vector<8x512xf32>
    %73 = arith.addf %71, %72 : vector<8x512xf32>
    %74 = vector.extract_strided_slice %73 {offsets = [0, 0], sizes = [8, 128], strides = [1, 1]} : vector<8x512xf32> to vector<8x128xf32>
    %75 = arith.negf %74 : vector<8x128xf32>
    %76 = math.exp %75 : vector<8x128xf32>
    %cst_29 = arith.constant 1.000000e+00 : f32
    %77 = vector.broadcast %cst_29 : f32 to vector<8x128xf32>
    %78 = arith.addf %77, %76 : vector<8x128xf32>
    %79 = arith.divf %77, %78 : vector<8x128xf32>
    %80 = vector.extract_strided_slice %73 {offsets = [0, 128], sizes = [8, 128], strides = [1, 1]} : vector<8x512xf32> to vector<8x128xf32>
    %81 = arith.negf %80 : vector<8x128xf32>
    %82 = math.exp %81 : vector<8x128xf32>
    %cst_30 = arith.constant 1.000000e+00 : f32
    %83 = vector.broadcast %cst_30 : f32 to vector<8x128xf32>
    %84 = arith.addf %83, %82 : vector<8x128xf32>
    %85 = arith.divf %83, %84 : vector<8x128xf32>
    %86 = vector.extract_strided_slice %73 {offsets = [0, 256], sizes = [8, 128], strides = [1, 1]} : vector<8x512xf32> to vector<8x128xf32>
    %87 = math.tanh %86 : vector<8x128xf32>
    %88 = vector.extract_strided_slice %73 {offsets = [0, 384], sizes = [8, 128], strides = [1, 1]} : vector<8x512xf32> to vector<8x128xf32>
    %89 = arith.negf %88 : vector<8x128xf32>
    %90 = math.exp %89 : vector<8x128xf32>
    %cst_31 = arith.constant 1.000000e+00 : f32
    %91 = vector.broadcast %cst_31 : f32 to vector<8x128xf32>
    %92 = arith.addf %91, %90 : vector<8x128xf32>
    %93 = arith.divf %91, %92 : vector<8x128xf32>
    %94 = arith.mulf %85, %68 : vector<8x128xf32>
    %95 = arith.mulf %79, %87 : vector<8x128xf32>
    %96 = arith.addf %94, %95 : vector<8x128xf32>
    %97 = math.tanh %96 : vector<8x128xf32>
    %98 = arith.mulf %93, %97 : vector<8x128xf32>
    %c24 = arith.constant 24 : index
    %c0_32 = arith.constant 0 : index
    %99 = vector.load %arg16[%c24, %c0_32] : memref<64x512xf32, #tpu.memory_space<vmem>>, vector<8x512xf32>
    %cst_33 = arith.constant dense<0.000000e+00> : vector<8x512xf32>
    %100 = tpu.matmul %98, %12, %cst_33 {dimension_numbers = #tpu.dot_dimension_numbers<[1], [0], [0], [1], [0, 0, 1, 1], [], []>} : vector<8x128xf32>, vector<128x512xf32>, vector<8x512xf32> -> vector<8x512xf32>
    %101 = arith.addf %99, %100 : vector<8x512xf32>
    %102 = vector.extract_strided_slice %101 {offsets = [0, 0], sizes = [8, 128], strides = [1, 1]} : vector<8x512xf32> to vector<8x128xf32>
    %103 = arith.negf %102 : vector<8x128xf32>
    %104 = math.exp %103 : vector<8x128xf32>
    %cst_34 = arith.constant 1.000000e+00 : f32
    %105 = vector.broadcast %cst_34 : f32 to vector<8x128xf32>
    %106 = arith.addf %105, %104 : vector<8x128xf32>
    %107 = arith.divf %105, %106 : vector<8x128xf32>
    %108 = vector.extract_strided_slice %101 {offsets = [0, 128], sizes = [8, 128], strides = [1, 1]} : vector<8x512xf32> to vector<8x128xf32>
    %109 = arith.negf %108 : vector<8x128xf32>
    %110 = math.exp %109 : vector<8x128xf32>
    %cst_35 = arith.constant 1.000000e+00 : f32
    %111 = vector.broadcast %cst_35 : f32 to vector<8x128xf32>
    %112 = arith.addf %111, %110 : vector<8x128xf32>
    %113 = arith.divf %111, %112 : vector<8x128xf32>
    %114 = vector.extract_strided_slice %101 {offsets = [0, 256], sizes = [8, 128], strides = [1, 1]} : vector<8x512xf32> to vector<8x128xf32>
    %115 = math.tanh %114 : vector<8x128xf32>
    %116 = vector.extract_strided_slice %101 {offsets = [0, 384], sizes = [8, 128], strides = [1, 1]} : vector<8x512xf32> to vector<8x128xf32>
    %117 = arith.negf %116 : vector<8x128xf32>
    %118 = math.exp %117 : vector<8x128xf32>
    %cst_36 = arith.constant 1.000000e+00 : f32
    %119 = vector.broadcast %cst_36 : f32 to vector<8x128xf32>
    %120 = arith.addf %119, %118 : vector<8x128xf32>
    %121 = arith.divf %119, %120 : vector<8x128xf32>
    %122 = arith.mulf %113, %96 : vector<8x128xf32>
    %123 = arith.mulf %107, %115 : vector<8x128xf32>
    %124 = arith.addf %122, %123 : vector<8x128xf32>
    %125 = math.tanh %124 : vector<8x128xf32>
    %126 = arith.mulf %121, %125 : vector<8x128xf32>
    %c32 = arith.constant 32 : index
    %c0_37 = arith.constant 0 : index
    %127 = vector.load %arg16[%c32, %c0_37] : memref<64x512xf32, #tpu.memory_space<vmem>>, vector<8x512xf32>
    %cst_38 = arith.constant dense<0.000000e+00> : vector<8x512xf32>
    %128 = tpu.matmul %126, %12, %cst_38 {dimension_numbers = #tpu.dot_dimension_numbers<[1], [0], [0], [1], [0, 0, 1, 1], [], []>} : vector<8x128xf32>, vector<128x512xf32>, vector<8x512xf32> -> vector<8x512xf32>
    %129 = arith.addf %127, %128 : vector<8x512xf32>
    %130 = vector.extract_strided_slice %129 {offsets = [0, 0], sizes = [8, 128], strides = [1, 1]} : vector<8x512xf32> to vector<8x128xf32>
    %131 = arith.negf %130 : vector<8x128xf32>
    %132 = math.exp %131 : vector<8x128xf32>
    %cst_39 = arith.constant 1.000000e+00 : f32
    %133 = vector.broadcast %cst_39 : f32 to vector<8x128xf32>
    %134 = arith.addf %133, %132 : vector<8x128xf32>
    %135 = arith.divf %133, %134 : vector<8x128xf32>
    %136 = vector.extract_strided_slice %129 {offsets = [0, 128], sizes = [8, 128], strides = [1, 1]} : vector<8x512xf32> to vector<8x128xf32>
    %137 = arith.negf %136 : vector<8x128xf32>
    %138 = math.exp %137 : vector<8x128xf32>
    %cst_40 = arith.constant 1.000000e+00 : f32
    %139 = vector.broadcast %cst_40 : f32 to vector<8x128xf32>
    %140 = arith.addf %139, %138 : vector<8x128xf32>
    %141 = arith.divf %139, %140 : vector<8x128xf32>
    %142 = vector.extract_strided_slice %129 {offsets = [0, 256], sizes = [8, 128], strides = [1, 1]} : vector<8x512xf32> to vector<8x128xf32>
    %143 = math.tanh %142 : vector<8x128xf32>
    %144 = vector.extract_strided_slice %129 {offsets = [0, 384], sizes = [8, 128], strides = [1, 1]} : vector<8x512xf32> to vector<8x128xf32>
    %145 = arith.negf %144 : vector<8x128xf32>
    %146 = math.exp %145 : vector<8x128xf32>
    %cst_41 = arith.constant 1.000000e+00 : f32
    %147 = vector.broadcast %cst_41 : f32 to vector<8x128xf32>
    %148 = arith.addf %147, %146 : vector<8x128xf32>
    %149 = arith.divf %147, %148 : vector<8x128xf32>
    %150 = arith.mulf %141, %124 : vector<8x128xf32>
    %151 = arith.mulf %135, %143 : vector<8x128xf32>
    %152 = arith.addf %150, %151 : vector<8x128xf32>
    %153 = math.tanh %152 : vector<8x128xf32>
    %154 = arith.mulf %149, %153 : vector<8x128xf32>
    %c40 = arith.constant 40 : index
    %c0_42 = arith.constant 0 : index
    %155 = vector.load %arg16[%c40, %c0_42] : memref<64x512xf32, #tpu.memory_space<vmem>>, vector<8x512xf32>
    %cst_43 = arith.constant dense<0.000000e+00> : vector<8x512xf32>
    %156 = tpu.matmul %154, %12, %cst_43 {dimension_numbers = #tpu.dot_dimension_numbers<[1], [0], [0], [1], [0, 0, 1, 1], [], []>} : vector<8x128xf32>, vector<128x512xf32>, vector<8x512xf32> -> vector<8x512xf32>
    %157 = arith.addf %155, %156 : vector<8x512xf32>
    %158 = vector.extract_strided_slice %157 {offsets = [0, 0], sizes = [8, 128], strides = [1, 1]} : vector<8x512xf32> to vector<8x128xf32>
    %159 = arith.negf %158 : vector<8x128xf32>
    %160 = math.exp %159 : vector<8x128xf32>
    %cst_44 = arith.constant 1.000000e+00 : f32
    %161 = vector.broadcast %cst_44 : f32 to vector<8x128xf32>
    %162 = arith.addf %161, %160 : vector<8x128xf32>
    %163 = arith.divf %161, %162 : vector<8x128xf32>
    %164 = vector.extract_strided_slice %157 {offsets = [0, 128], sizes = [8, 128], strides = [1, 1]} : vector<8x512xf32> to vector<8x128xf32>
    %165 = arith.negf %164 : vector<8x128xf32>
    %166 = math.exp %165 : vector<8x128xf32>
    %cst_45 = arith.constant 1.000000e+00 : f32
    %167 = vector.broadcast %cst_45 : f32 to vector<8x128xf32>
    %168 = arith.addf %167, %166 : vector<8x128xf32>
    %169 = arith.divf %167, %168 : vector<8x128xf32>
    %170 = vector.extract_strided_slice %157 {offsets = [0, 256], sizes = [8, 128], strides = [1, 1]} : vector<8x512xf32> to vector<8x128xf32>
    %171 = math.tanh %170 : vector<8x128xf32>
    %172 = vector.extract_strided_slice %157 {offsets = [0, 384], sizes = [8, 128], strides = [1, 1]} : vector<8x512xf32> to vector<8x128xf32>
    %173 = arith.negf %172 : vector<8x128xf32>
    %174 = math.exp %173 : vector<8x128xf32>
    %cst_46 = arith.constant 1.000000e+00 : f32
    %175 = vector.broadcast %cst_46 : f32 to vector<8x128xf32>
    %176 = arith.addf %175, %174 : vector<8x128xf32>
    %177 = arith.divf %175, %176 : vector<8x128xf32>
    %178 = arith.mulf %169, %152 : vector<8x128xf32>
    %179 = arith.mulf %163, %171 : vector<8x128xf32>
    %180 = arith.addf %178, %179 : vector<8x128xf32>
    %181 = math.tanh %180 : vector<8x128xf32>
    %182 = arith.mulf %177, %181 : vector<8x128xf32>
    %c48 = arith.constant 48 : index
    %c0_47 = arith.constant 0 : index
    %183 = vector.load %arg16[%c48, %c0_47] : memref<64x512xf32, #tpu.memory_space<vmem>>, vector<8x512xf32>
    %cst_48 = arith.constant dense<0.000000e+00> : vector<8x512xf32>
    %184 = tpu.matmul %182, %12, %cst_48 {dimension_numbers = #tpu.dot_dimension_numbers<[1], [0], [0], [1], [0, 0, 1, 1], [], []>} : vector<8x128xf32>, vector<128x512xf32>, vector<8x512xf32> -> vector<8x512xf32>
    %185 = arith.addf %183, %184 : vector<8x512xf32>
    %186 = vector.extract_strided_slice %185 {offsets = [0, 0], sizes = [8, 128], strides = [1, 1]} : vector<8x512xf32> to vector<8x128xf32>
    %187 = arith.negf %186 : vector<8x128xf32>
    %188 = math.exp %187 : vector<8x128xf32>
    %cst_49 = arith.constant 1.000000e+00 : f32
    %189 = vector.broadcast %cst_49 : f32 to vector<8x128xf32>
    %190 = arith.addf %189, %188 : vector<8x128xf32>
    %191 = arith.divf %189, %190 : vector<8x128xf32>
    %192 = vector.extract_strided_slice %185 {offsets = [0, 128], sizes = [8, 128], strides = [1, 1]} : vector<8x512xf32> to vector<8x128xf32>
    %193 = arith.negf %192 : vector<8x128xf32>
    %194 = math.exp %193 : vector<8x128xf32>
    %cst_50 = arith.constant 1.000000e+00 : f32
    %195 = vector.broadcast %cst_50 : f32 to vector<8x128xf32>
    %196 = arith.addf %195, %194 : vector<8x128xf32>
    %197 = arith.divf %195, %196 : vector<8x128xf32>
    %198 = vector.extract_strided_slice %185 {offsets = [0, 256], sizes = [8, 128], strides = [1, 1]} : vector<8x512xf32> to vector<8x128xf32>
    %199 = math.tanh %198 : vector<8x128xf32>
    %200 = vector.extract_strided_slice %185 {offsets = [0, 384], sizes = [8, 128], strides = [1, 1]} : vector<8x512xf32> to vector<8x128xf32>
    %201 = arith.negf %200 : vector<8x128xf32>
    %202 = math.exp %201 : vector<8x128xf32>
    %cst_51 = arith.constant 1.000000e+00 : f32
    %203 = vector.broadcast %cst_51 : f32 to vector<8x128xf32>
    %204 = arith.addf %203, %202 : vector<8x128xf32>
    %205 = arith.divf %203, %204 : vector<8x128xf32>
    %206 = arith.mulf %197, %180 : vector<8x128xf32>
    %207 = arith.mulf %191, %199 : vector<8x128xf32>
    %208 = arith.addf %206, %207 : vector<8x128xf32>
    %209 = math.tanh %208 : vector<8x128xf32>
    %210 = arith.mulf %205, %209 : vector<8x128xf32>
    %c56 = arith.constant 56 : index
    %c0_52 = arith.constant 0 : index
    %211 = vector.load %arg16[%c56, %c0_52] : memref<64x512xf32, #tpu.memory_space<vmem>>, vector<8x512xf32>
    %cst_53 = arith.constant dense<0.000000e+00> : vector<8x512xf32>
    %212 = tpu.matmul %210, %12, %cst_53 {dimension_numbers = #tpu.dot_dimension_numbers<[1], [0], [0], [1], [0, 0, 1, 1], [], []>} : vector<8x128xf32>, vector<128x512xf32>, vector<8x512xf32> -> vector<8x512xf32>
    %213 = arith.addf %211, %212 : vector<8x512xf32>
    %214 = vector.extract_strided_slice %213 {offsets = [0, 0], sizes = [8, 128], strides = [1, 1]} : vector<8x512xf32> to vector<8x128xf32>
    %215 = arith.negf %214 : vector<8x128xf32>
    %216 = math.exp %215 : vector<8x128xf32>
    %cst_54 = arith.constant 1.000000e+00 : f32
    %217 = vector.broadcast %cst_54 : f32 to vector<8x128xf32>
    %218 = arith.addf %217, %216 : vector<8x128xf32>
    %219 = arith.divf %217, %218 : vector<8x128xf32>
    %220 = vector.extract_strided_slice %213 {offsets = [0, 128], sizes = [8, 128], strides = [1, 1]} : vector<8x512xf32> to vector<8x128xf32>
    %221 = arith.negf %220 : vector<8x128xf32>
    %222 = math.exp %221 : vector<8x128xf32>
    %cst_55 = arith.constant 1.000000e+00 : f32
    %223 = vector.broadcast %cst_55 : f32 to vector<8x128xf32>
    %224 = arith.addf %223, %222 : vector<8x128xf32>
    %225 = arith.divf %223, %224 : vector<8x128xf32>
    %226 = vector.extract_strided_slice %213 {offsets = [0, 256], sizes = [8, 128], strides = [1, 1]} : vector<8x512xf32> to vector<8x128xf32>
    %227 = math.tanh %226 : vector<8x128xf32>
    %228 = vector.extract_strided_slice %213 {offsets = [0, 384], sizes = [8, 128], strides = [1, 1]} : vector<8x512xf32> to vector<8x128xf32>
    %229 = arith.negf %228 : vector<8x128xf32>
    %230 = math.exp %229 : vector<8x128xf32>
    %cst_56 = arith.constant 1.000000e+00 : f32
    %231 = vector.broadcast %cst_56 : f32 to vector<8x128xf32>
    %232 = arith.addf %231, %230 : vector<8x128xf32>
    %233 = arith.divf %231, %232 : vector<8x128xf32>
    %234 = arith.mulf %225, %208 : vector<8x128xf32>
    %235 = arith.mulf %219, %227 : vector<8x128xf32>
    %236 = arith.addf %234, %235 : vector<8x128xf32>
    %237 = math.tanh %236 : vector<8x128xf32>
    %238 = arith.mulf %233, %237 : vector<8x128xf32>
    %c0_57 = arith.constant 0 : index
    %c0_58 = arith.constant 0 : index
    %239 = vector.load %arg6[%c0_57, %c0_58] : memref<128x128xf32, #tpu.memory_space<vmem>>, vector<128x128xf32>
    %cst_59 = arith.constant dense<0.000000e+00> : vector<8x128xf32>
    %240 = tpu.matmul %238, %239, %cst_59 {dimension_numbers = #tpu.dot_dimension_numbers<[1], [0], [0], [1], [0, 0, 1, 1], [], []>} : vector<8x128xf32>, vector<128x128xf32>, vector<8x128xf32> -> vector<8x128xf32>
    %c0_60 = arith.constant 0 : index
    %c0_61 = arith.constant 0 : index
    %241 = vector.load %arg7[%c0_60, %c0_61] : memref<1x128xf32, #tpu.memory_space<vmem>>, vector<1x128xf32>
    %242 = vector.broadcast %241 : vector<1x128xf32> to vector<8x128xf32>
    %243 = arith.addf %240, %242 : vector<8x128xf32>
    %cst_62 = arith.constant 0.000000e+00 : f32
    %244 = vector.broadcast %cst_62 : f32 to vector<8x128xf32>
    %245 = arith.maximumf %243, %244 : vector<8x128xf32>
    %c0_63 = arith.constant 0 : index
    %c0_64 = arith.constant 0 : index
    %246 = vector.load %arg8[%c0_63, %c0_64] : memref<128x128xf32, #tpu.memory_space<vmem>>, vector<128x128xf32>
    %cst_65 = arith.constant dense<0.000000e+00> : vector<8x128xf32>
    %247 = tpu.matmul %245, %246, %cst_65 {dimension_numbers = #tpu.dot_dimension_numbers<[1], [0], [0], [1], [0, 0, 1, 1], [], []>} : vector<8x128xf32>, vector<128x128xf32>, vector<8x128xf32> -> vector<8x128xf32>
    %c0_66 = arith.constant 0 : index
    %c0_67 = arith.constant 0 : index
    %248 = vector.load %arg9[%c0_66, %c0_67] : memref<1x128xf32, #tpu.memory_space<vmem>>, vector<1x128xf32>
    %249 = vector.broadcast %248 : vector<1x128xf32> to vector<8x128xf32>
    %250 = arith.addf %247, %249 : vector<8x128xf32>
    %c0_68 = arith.constant 0 : index
    %c0_69 = arith.constant 0 : index
    %251 = vector.load %arg10[%c0_68, %c0_69] : memref<128x128xf32, #tpu.memory_space<vmem>>, vector<128x128xf32>
    %cst_70 = arith.constant dense<0.000000e+00> : vector<8x128xf32>
    %252 = tpu.matmul %245, %251, %cst_70 {dimension_numbers = #tpu.dot_dimension_numbers<[1], [0], [0], [1], [0, 0, 1, 1], [], []>} : vector<8x128xf32>, vector<128x128xf32>, vector<8x128xf32> -> vector<8x128xf32>
    %c0_71 = arith.constant 0 : index
    %c0_72 = arith.constant 0 : index
    %253 = vector.load %arg11[%c0_71, %c0_72] : memref<1x128xf32, #tpu.memory_space<vmem>>, vector<1x128xf32>
    %254 = vector.broadcast %253 : vector<1x128xf32> to vector<8x128xf32>
    %255 = arith.addf %252, %254 : vector<8x128xf32>
    %cst_73 = arith.constant -2.000000e+01 : f32
    %cst_74 = arith.constant 0.000000e+00 : f32
    %256 = vector.broadcast %cst_73 : f32 to vector<8x128xf32>
    %257 = arith.maximumf %256, %255 : vector<8x128xf32>
    %258 = vector.broadcast %cst_74 : f32 to vector<8x128xf32>
    %259 = arith.minimumf %258, %257 : vector<8x128xf32>
    %260 = math.exp %259 : vector<8x128xf32>
    %c0_75 = arith.constant 0 : index
    %c0_76 = arith.constant 0 : index
    %261 = vector.load %arg12[%c0_75, %c0_76] : memref<8x128xf32, #tpu.memory_space<vmem>>, vector<8x128xf32>
    %262 = arith.mulf %260, %261 : vector<8x128xf32>
    %263 = arith.addf %250, %262 : vector<8x128xf32>
    %c0_77 = arith.constant 0 : index
    %c0_78 = arith.constant 0 : index
    %264 = vector.load %arg13[%c0_77, %c0_78] : memref<8x128xf32, #tpu.memory_space<vmem>>, vector<8x128xf32>
    tpu.vector_store %arg13[%c0_77, %c0_78], %263 {strides = array<i32>} : memref<8x128xf32, #tpu.memory_space<vmem>>, vector<8x128xf32>,
    %c0_79 = arith.constant 0 : index
    %c0_80 = arith.constant 0 : index
    %265 = vector.load %arg14[%c0_79, %c0_80] : memref<8x128xf32, #tpu.memory_space<vmem>>, vector<8x128xf32>
    tpu.vector_store %arg14[%c0_79, %c0_80], %250 {strides = array<i32>} : memref<8x128xf32, #tpu.memory_space<vmem>>, vector<8x128xf32>,
    %c0_81 = arith.constant 0 : index
    %c0_82 = arith.constant 0 : index
    %266 = vector.load %arg15[%c0_81, %c0_82] : memref<8x128xf32, #tpu.memory_space<vmem>>, vector<8x128xf32>
    tpu.vector_store %arg15[%c0_81, %c0_82], %260 {strides = array<i32>} : memref<8x128xf32, #tpu.memory_space<vmem>>, vector<8x128xf32>,
    return
  }
}

</mosaic_0001>

<llo_original>
// kernel: tpu_custom_call.1
$region0: #{tpu_custom_call.1}
  #allocation0 [shape = 'u32[]', space=smem, size = 0x4, offset = 0x4, fixed_abs, tag = 'smem constant byte address 0x4 - core index']
  #allocation1 [shape = 'u32[72,128]{1,0:T(1,128)}', space=vmem, size = 0x9000, scoped, tag = 'internal scratch']
  #allocation2 [shape = 'f32[64,512]{1,0:T(8,128)}', space=vmem, size = 0x20000, scoped, tag = 'scratch operand']
  %s0 = inlined_call_operand.vmem [shape: f32[64,4], index: 0, kind: input, shape index: {}]
  %s1 = inlined_call_operand.vmem [shape: f32[4,128], index: 1, kind: input, shape index: {}]
  %s2 = inlined_call_operand.vmem [shape: f32[1,128], index: 2, kind: input, shape index: {}]
  %s3 = inlined_call_operand.hbm [shape: f32[128,512], index: 3, kind: input, shape index: {}]
  %s4 = inlined_call_operand.hbm [shape: f32[128,512], index: 4, kind: input, shape index: {}]
  %s5 = inlined_call_operand.vmem [shape: f32[1,512], index: 5, kind: input, shape index: {}]
  %s6 = inlined_call_operand.hbm [shape: f32[128,128], index: 6, kind: input, shape index: {}]
  %s7 = inlined_call_operand.vmem [shape: f32[1,128], index: 7, kind: input, shape index: {}]
  %s8 = inlined_call_operand.hbm [shape: f32[128,128], index: 8, kind: input, shape index: {}]
  %s9 = inlined_call_operand.vmem [shape: f32[1,128], index: 9, kind: input, shape index: {}]
  %s10 = inlined_call_operand.hbm [shape: f32[128,128], index: 10, kind: input, shape index: {}]
  %s11 = inlined_call_operand.vmem [shape: f32[1,128], index: 11, kind: input, shape index: {}]
  %s12 = inlined_call_operand.vmem [shape: f32[8,128], index: 12, kind: input, shape index: {}]
  %s13 = inlined_call_operand.hbm [shape: f32[8,128], index: 13, kind: output, shape index: {0}]
  %s14 = inlined_call_operand.hbm [shape: f32[8,128], index: 14, kind: output, shape index: {1}]
  %s15 = inlined_call_operand.hbm [shape: f32[8,128], index: 15, kind: output, shape index: {2}]
  %16 = xla_tuple %s13, %s14, %s15
  %s17 = sld [smem:[#allocation0]]
  $region98: #{tpu_custom_call.1} parent=0
    _
  %s19 = ssub.s32 1, %s17
  %s20 = scalar_select 0, %s19, %s17
  $region1: #{tpu_custom_call.1} parent=0
    #allocation3 [shape = 'u8[262144]{0}', space=vmem, size = 0x40000, scoped, tag = 'input window, operand 3, single buffered']
    #allocation4 [shape = 's32[1]{0}', space=sflag, size = 0x4, scoped, tag = 'scoped memory for tpu_custom_call.1']
    #allocation5 [shape = 's32[1]{0}', space=sflag, size = 0x4, scoped, tag = 'scoped memory for tpu_custom_call.1']
    #allocation6 [shape = 'u8[262144]{0}', space=vmem, size = 0x40000, scoped, tag = 'input window, operand 4, single buffered']
    #allocation7 [shape = 's32[1]{0}', space=sflag, size = 0x4, scoped, tag = 'scoped memory for tpu_custom_call.1']
    #allocation8 [shape = 'u8[65536]{0}', space=vmem, size = 0x10000, scoped, tag = 'input window, operand 6, single buffered']
    #allocation9 [shape = 'u8[65536]{0}', space=vmem, size = 0x10000, scoped, tag = 'input window, operand 8, single buffered']
    #allocation10 [shape = 's32[1]{0}', space=sflag, size = 0x4, scoped, tag = 'scoped memory for tpu_custom_call.1']
    #allocation11 [shape = 'u8[65536]{0}', space=vmem, size = 0x10000, scoped, tag = 'input window, operand 10, single buffered']
    #allocation12 [shape = 'u8[4096]{0}', space=vmem, size = 0x1000, scoped, tag = 'output window, operand 0, single buffered']
    #allocation13 [shape = 'u8[4096]{0}', space=vmem, size = 0x1000, scoped, tag = 'output window, operand 1, single buffered']
    #allocation14 [shape = 's32[1]{0}', space=sflag, size = 0x4, scoped, tag = 'scoped memory for tpu_custom_call.1']
    #allocation15 [shape = 'u8[4096]{0}', space=vmem, size = 0x1000, scoped, tag = 'output window, operand 2, single buffered']
    %21 = vsyncpa [#allocation4], 0
    %22 = vsyncpa [#allocation7], 0
    %23 = vsyncpa [#allocation10], 0
    %24 = vsyncpa [#allocation5], 0
    %25 = vsyncpa [#allocation14], 0
    // Predicated region
    $region2: #{tpu_custom_call.1} parent=1 // pred_check
      _
    $region3: #{tpu_custom_call.1} parent=1 // pred_check_branch
      %27 = sbr.rel (0) target = $region5
    $region4: #{tpu_custom_call.1} parent=1 // pred_region
      _
    $region5: #{tpu_custom_call.1} parent=1 // pred_fallthru
      _
    // Predicated region
    $region6: #{tpu_custom_call.1} parent=1 // pred_check
      _
    $region7: #{tpu_custom_call.1} parent=1 // pred_check_branch
      %29 = sbr.rel (0) target = $region9
    $region8: #{tpu_custom_call.1} parent=1 // pred_region
      _
    $region9: #{tpu_custom_call.1} parent=1 // pred_fallthru
      _
    // Predicated region
    $region10: #{tpu_custom_call.1} parent=1 // pred_check
      _
    $region11: #{tpu_custom_call.1} parent=1 // pred_check_branch
      %31 = sbr.rel (0) target = $region13
    $region12: #{tpu_custom_call.1} parent=1 // pred_region
      _
    $region13: #{tpu_custom_call.1} parent=1 // pred_fallthru
      _
    // Predicated region
    $region14: #{tpu_custom_call.1} parent=1 // pred_check
      _
    $region15: #{tpu_custom_call.1} parent=1 // pred_check_branch
      %33 = sbr.rel (0) target = $region17
    $region16: #{tpu_custom_call.1} parent=1 // pred_region
      %35 = vsyncadd [#allocation4], 0
      %s36 = sshll.u32 %s3, 4
      %s37 = int_to_ptr.hbm [resolvable:$true] %s36
      %s38 = sshll.u32 [#allocation3], 4
      %s39 = int_to_ptr.vmem [resolvable:$true] %s38
      %44 = dma.hbm_to_vmem [thread:$0]  %s37, 8192, %s39, [#allocation4], 512, 512, 32
    $region17: #{tpu_custom_call.1} parent=1 // pred_fallthru
      _
    // Predicated region
    $region18: #{tpu_custom_call.1} parent=1 // pred_check
      _
    $region19: #{tpu_custom_call.1} parent=1 // pred_check_branch
      %46 = sbr.rel (0) target = $region21
    $region20: #{tpu_custom_call.1} parent=1 // pred_region
      %48 = vsyncadd [#allocation7], 0
      %s49 = sshll.u32 %s4, 4
      %s50 = int_to_ptr.hbm [resolvable:$true] %s49
      %s51 = sshll.u32 [#allocation6], 4
      %s52 = int_to_ptr.vmem [resolvable:$true] %s51
      %57 = dma.hbm_to_vmem [thread:$0]  %s50, 8192, %s52, [#allocation7], 512, 512, 32
    $region21: #{tpu_custom_call.1} parent=1 // pred_fallthru
      _
    // Predicated region
    $region22: #{tpu_custom_call.1} parent=1 // pred_check
      _
    $region23: #{tpu_custom_call.1} parent=1 // pred_check_branch
      %59 = sbr.rel (0) target = $region25
    $region24: #{tpu_custom_call.1} parent=1 // pred_region
      _
    $region25: #{tpu_custom_call.1} parent=1 // pred_fallthru
      _
    // Predicated region
    $region26: #{tpu_custom_call.1} parent=1 // pred_check
      _
    $region27: #{tpu_custom_call.1} parent=1 // pred_check_branch
      %61 = sbr.rel (0) target = $region29
    $region28: #{tpu_custom_call.1} parent=1 // pred_region
      %63 = vsyncadd [#allocation7], 0
      %s64 = sshll.u32 %s6, 4
      %s65 = int_to_ptr.hbm [resolvable:$true] %s64
      %s66 = sshll.u32 [#allocation8], 4
      %s67 = int_to_ptr.vmem [resolvable:$true] %s66
      %72 = dma.hbm_to_vmem [thread:$0]  %s65, 2048, %s67, [#allocation7], 128, 128, 8
    $region29: #{tpu_custom_call.1} parent=1 // pred_fallthru
      _
    // Predicated region
    $region30: #{tpu_custom_call.1} parent=1 // pred_check
      _
    $region31: #{tpu_custom_call.1} parent=1 // pred_check_branch
      %74 = sbr.rel (0) target = $region33
    $region32: #{tpu_custom_call.1} parent=1 // pred_region
      _
    $region33: #{tpu_custom_call.1} parent=1 // pred_fallthru
      _
    // Predicated region
    $region34: #{tpu_custom_call.1} parent=1 // pred_check
      _
    $region35: #{tpu_custom_call.1} parent=1 // pred_check_branch
      %76 = sbr.rel (0) target = $region37
    $region36: #{tpu_custom_call.1} parent=1 // pred_region
      %78 = vsyncadd [#allocation10], 0
      %s79 = sshll.u32 %s8, 4
      %s80 = int_to_ptr.hbm [resolvable:$true] %s79
      %s81 = sshll.u32 [#allocation9], 4
      %s82 = int_to_ptr.vmem [resolvable:$true] %s81
      %87 = dma.hbm_to_vmem [thread:$0]  %s80, 2048, %s82, [#allocation10], 128, 128, 8
    $region37: #{tpu_custom_call.1} parent=1 // pred_fallthru
      _
    // Predicated region
    $region38: #{tpu_custom_call.1} parent=1 // pred_check
      _
    $region39: #{tpu_custom_call.1} parent=1 // pred_check_branch
      %89 = sbr.rel (0) target = $region41
    $region40: #{tpu_custom_call.1} parent=1 // pred_region
      _
    $region41: #{tpu_custom_call.1} parent=1 // pred_fallthru
      _
    // Predicated region
    $region42: #{tpu_custom_call.1} parent=1 // pred_check
      _
    $region43: #{tpu_custom_call.1} parent=1 // pred_check_branch
      %91 = sbr.rel (0) target = $region45
    $region44: #{tpu_custom_call.1} parent=1 // pred_region
      %93 = vsyncadd [#allocation10], 0
      %s94 = sshll.u32 %s10, 4
      %s95 = int_to_ptr.hbm [resolvable:$true] %s94
      %s96 = sshll.u32 [#allocation11], 4
      %s97 = int_to_ptr.vmem [resolvable:$true] %s96
      %102 = dma.hbm_to_vmem [thread:$0]  %s95, 2048, %s97, [#allocation10], 128, 128, 8
    $region45: #{tpu_custom_call.1} parent=1 // pred_fallthru
      _
    // Predicated region
    $region46: #{tpu_custom_call.1} parent=1 // pred_check
      _
    $region47: #{tpu_custom_call.1} parent=1 // pred_check_branch
      %104 = sbr.rel (0) target = $region49
    $region48: #{tpu_custom_call.1} parent=1 // pred_region
      _
    $region49: #{tpu_custom_call.1} parent=1 // pred_fallthru
      _
    // Predicated region
    $region50: #{tpu_custom_call.1} parent=1 // pred_check
      _
    $region51: #{tpu_custom_call.1} parent=1 // pred_check_branch
      %106 = sbr.rel (0) target = $region53
    $region52: #{tpu_custom_call.1} parent=1 // pred_region
      _
    $region53: #{tpu_custom_call.1} parent=1 // pred_fallthru
      _
    // Predicated region
    $region54: #{tpu_custom_call.1} parent=1 // pred_check
      _
    $region55: #{tpu_custom_call.1} parent=1 // pred_check_branch
      %108 = sbr.rel (0) target = $region57
    $region56: #{tpu_custom_call.1} parent=1 // pred_region
      %110 = dma.done [#allocation4], 8192
    $region57: #{tpu_custom_call.1} parent=1 // pred_fallthru
      _
    // Predicated region
    $region58: #{tpu_custom_call.1} parent=1 // pred_check
      _
    $region59: #{tpu_custom_call.1} parent=1 // pred_check_branch
      %112 = sbr.rel (0) target = $region61
    $region60: #{tpu_custom_call.1} parent=1 // pred_region
      %114 = dma.done [#allocation7], 8192
    $region61: #{tpu_custom_call.1} parent=1 // pred_fallthru
      _
    // Predicated region
    $region62: #{tpu_custom_call.1} parent=1 // pred_check
      _
    $region63: #{tpu_custom_call.1} parent=1 // pred_check_branch
      %116 = sbr.rel (0) target = $region65
    $region64: #{tpu_custom_call.1} parent=1 // pred_region
      %118 = dma.done [#allocation7], 2048
    $region65: #{tpu_custom_call.1} parent=1 // pred_fallthru
      _
    // Predicated region
    $region66: #{tpu_custom_call.1} parent=1 // pred_check
      _
    $region67: #{tpu_custom_call.1} parent=1 // pred_check_branch
      %120 = sbr.rel (0) target = $region69
    $region68: #{tpu_custom_call.1} parent=1 // pred_region
      %122 = dma.done [#allocation10], 2048
    $region69: #{tpu_custom_call.1} parent=1 // pred_fallthru
      _
    // Predicated region
    $region70: #{tpu_custom_call.1} parent=1 // pred_check
      _
    $region71: #{tpu_custom_call.1} parent=1 // pred_check_branch
      %124 = sbr.rel (0) target = $region73
    $region72: #{tpu_custom_call.1} parent=1 // pred_region
      %126 = dma.done [#allocation10], 2048
    $region73: #{tpu_custom_call.1} parent=1 // pred_fallthru
      _
    %v127 = vld [vmem:[%s0] sm:$0xff]
    %v128 = vld [vmem:[%s0 + $0x8] sm:$0xff]
    %v129 = vld [vmem:[%s0 + $0x10] sm:$0xff]
    %v130 = vld [vmem:[%s0 + $0x18] sm:$0xff]
    %v131 = vld [vmem:[%s0 + $0x20] sm:$0xff]
    %v132 = vld [vmem:[%s0 + $0x28] sm:$0xff]
    %v133 = vld [vmem:[%s0 + $0x30] sm:$0xff]
    %v134 = vld [vmem:[%s0 + $0x38] sm:$0xff]
    %v135 = vld [vmem:[%s1] sm:$0xf]
    %v136 = vld [vmem:[%s2] sm:$0x1]
    %v138 = vperm.slane %v136, 0
    %vm140 = vcmask 31744
    %v142 = vsel %vm140, %v127, 0
    %v145 = vsel %vm140, %v128, 0
    %v148 = vsel %vm140, %v129, 0
    %v151 = vsel %vm140, %v130, 0
    %v154 = vsel %vm140, %v131, 0
    %v157 = vsel %vm140, %v132, 0
    %v160 = vsel %vm140, %v133, 0
    %v163 = vsel %vm140, %v134, 0
    %vm165 = vcmask 1043456
    %v167 = vsel %vm165, %v135, 0
    %169 = vmatpush.msra.mxu0 0.0
    %170 = vmatpush.msra.mxu0 0.0
    %171 = vmatpush.msra.mxu0 0.0
    %172 = vmatpush.msra.mxu0 0.0
    %173 = vmatpush.msra.mxu0 0.0
    %174 = vmatpush.msra.mxu0 0.0
    %175 = vmatpush.msra.mxu0 0.0
    %176 = vmatpush.msra.mxu0 0.0
    %177 = vmatpush.msra.mxu0 0.0
    %178 = vmatpush.msra.mxu0 0.0
    %179 = vmatpush.msra.mxu0 0.0
    %180 = vmatpush.msra.mxu0 0.0
    %181 = vmatpush.msra.mxu0 0.0
    %182 = vmatpush.msra.mxu0 0.0
    %183 = vmatpush.msra.mxu0 0.0
    %184 = vmatpush.msra.mxu0 %v167
    %185 = vmatmul.f32.gmra.mxu0 %v142
    %v186 = vpop.f32.mrf.mxu0
    %v187 = vadd.f32 %v138, %v186
    %188 = vmatmul.f32.gmra.mxu0 %v145
    %v189 = vpop.f32.mrf.mxu0
    %v190 = vadd.f32 %v138, %v189
    %191 = vmatmul.f32.gmra.mxu0 %v148
    %v192 = vpop.f32.mrf.mxu0
    %v193 = vadd.f32 %v138, %v192
    %194 = vmatmul.f32.gmra.mxu0 %v151
    %v195 = vpop.f32.mrf.mxu0
    %v196 = vadd.f32 %v138, %v195
    %197 = vmatmul.f32.gmra.mxu0 %v154
    %v198 = vpop.f32.mrf.mxu0
    %v199 = vadd.f32 %v138, %v198
    %200 = vmatmul.f32.gmra.mxu0 %v157
    %v201 = vpop.f32.mrf.mxu0
    %v202 = vadd.f32 %v138, %v201
    %203 = vmatmul.f32.gmra.mxu0 %v160
    %v204 = vpop.f32.mrf.mxu0
    %v205 = vadd.f32 %v138, %v204
    %206 = vmatmul.f32.gmra.mxu0 %v163
    %v207 = vpop.f32.mrf.mxu0
    %v208 = vadd.f32 %v138, %v207
    %209 = vdwg.mxu0
    %v210 = vld [vmem:[#allocation3] sm:$0xff]
    %v211 = vld [vmem:[#allocation3 + $0x8] sm:$0xff]
    %v212 = vld [vmem:[#allocation3 + $0x10] sm:$0xff]
    %v213 = vld [vmem:[#allocation3 + $0x18] sm:$0xff]
    %v214 = vld [vmem:[#allocation3 + $0x20] sm:$0xff]
    %v215 = vld [vmem:[#allocation3 + $0x28] sm:$0xff]
    %v216 = vld [vmem:[#allocation3 + $0x30] sm:$0xff]
    %v217 = vld [vmem:[#allocation3 + $0x38] sm:$0xff]
    %v218 = vld [vmem:[#allocation3 + $0x40] sm:$0xff]
    %v219 = vld [vmem:[#allocation3 + $0x48] sm:$0xff]
    %v220 = vld [vmem:[#allocation3 + $0x50] sm:$0xff]
    %v221 = vld [vmem:[#allocation3 + $0x58] sm:$0xff]
    %v222 = vld [vmem:[#allocation3 + $0x60] sm:$0xff]
    %v223 = vld [vmem:[#allocation3 + $0x68] sm:$0xff]
    %v224 = vld [vmem:[#allocation3 + $0x70] sm:$0xff]
    %v225 = vld [vmem:[#allocation3 + $0x78] sm:$0xff]
    %v226 = vld [vmem:[#allocation3 + $0x80] sm:$0xff]
    %v227 = vld [vmem:[#allocation3 + $0x88] sm:$0xff]
    %v228 = vld [vmem:[#allocation3 + $0x90] sm:$0xff]
    %v229 = vld [vmem:[#allocation3 + $0x98] sm:$0xff]
    %v230 = vld [vmem:[#allocation3 + $0xa0] sm:$0xff]
    %v231 = vld [vmem:[#allocation3 + $0xa8] sm:$0xff]
    %v232 = vld [vmem:[#allocation3 + $0xb0] sm:$0xff]
    %v233 = vld [vmem:[#allocation3 + $0xb8] sm:$0xff]
    %v234 = vld [vmem:[#allocation3 + $0xc0] sm:$0xff]
    %v235 = vld [vmem:[#allocation3 + $0xc8] sm:$0xff]
    %v236 = vld [vmem:[#allocation3 + $0xd0] sm:$0xff]
    %v237 = vld [vmem:[#allocation3 + $0xd8] sm:$0xff]
    %v238 = vld [vmem:[#allocation3 + $0xe0] sm:$0xff]
    %v239 = vld [vmem:[#allocation3 + $0xe8] sm:$0xff]
    %v240 = vld [vmem:[#allocation3 + $0xf0] sm:$0xff]
    %v241 = vld [vmem:[#allocation3 + $0xf8] sm:$0xff]
    %v242 = vld [vmem:[#allocation3 + $0x100] sm:$0xff]
    %v243 = vld [vmem:[#allocation3 + $0x108] sm:$0xff]
    %v244 = vld [vmem:[#allocation3 + $0x110] sm:$0xff]
    %v245 = vld [vmem:[#allocation3 + $0x118] sm:$0xff]
    %v246 = vld [vmem:[#allocation3 + $0x120] sm:$0xff]
    %v247 = vld [vmem:[#allocation3 + $0x128] sm:$0xff]
    %v248 = vld [vmem:[#allocation3 + $0x130] sm:$0xff]
    %v249 = vld [vmem:[#allocation3 + $0x138] sm:$0xff]
    %v250 = vld [vmem:[#allocation3 + $0x140] sm:$0xff]
    %v251 = vld [vmem:[#allocation3 + $0x148] sm:$0xff]
    %v252 = vld [vmem:[#allocation3 + $0x150] sm:$0xff]
    %v253 = vld [vmem:[#allocation3 + $0x158] sm:$0xff]
    %v254 = vld [vmem:[#allocation3 + $0x160] sm:$0xff]
    %v255 = vld [vmem:[#allocation3 + $0x168] sm:$0xff]
    %v256 = vld [vmem:[#allocation3 + $0x170] sm:$0xff]
    %v257 = vld [vmem:[#allocation3 + $0x178] sm:$0xff]
    %v258 = vld [vmem:[#allocation3 + $0x180] sm:$0xff]
    %v259 = vld [vmem:[#allocation3 + $0x188] sm:$0xff]
    %v260 = vld [vmem:[#allocation3 + $0x190] sm:$0xff]
    %v261 = vld [vmem:[#allocation3 + $0x198] sm:$0xff]
    %v262 = vld [vmem:[#allocation3 + $0x1a0] sm:$0xff]
    %v263 = vld [vmem:[#allocation3 + $0x1a8] sm:$0xff]
    %v264 = vld [vmem:[#allocation3 + $0x1b0] sm:$0xff]
    %v265 = vld [vmem:[#allocation3 + $0x1b8] sm:$0xff]
    %v266 = vld [vmem:[#allocation3 + $0x1c0] sm:$0xff]
    %v267 = vld [vmem:[#allocation3 + $0x1c8] sm:$0xff]
    %v268 = vld [vmem:[#allocation3 + $0x1d0] sm:$0xff]
    %v269 = vld [vmem:[#allocation3 + $0x1d8] sm:$0xff]
    %v270 = vld [vmem:[#allocation3 + $0x1e0] sm:$0xff]
    %v271 = vld [vmem:[#allocation3 + $0x1e8] sm:$0xff]
    %v272 = vld [vmem:[#allocation3 + $0x1f0] sm:$0xff]
    %v273 = vld [vmem:[#allocation3 + $0x1f8] sm:$0xff]
    %v274 = vld [vmem:[%s5] sm:$0xf]
    %v276 = vperm.slane %v274, 0
    %v277 = vperm.slane %v274, 1
    %v278 = vperm.slane %v274, 2
    %v279 = vperm.slane %v274, 3
    %284 = vmatpush.msra.mxu0 %v270
    %285 = vmatpush.msra.mxu0 %v266
    %286 = vmatpush.msra.mxu0 %v262
    %287 = vmatpush.msra.mxu0 %v258
    %288 = vmatpush.msra.mxu0 %v254
    %289 = vmatpush.msra.mxu0 %v250
    %290 = vmatpush.msra.mxu0 %v246
    %291 = vmatpush.msra.mxu0 %v242
    %292 = vmatpush.msra.mxu0 %v238
    %293 = vmatpush.msra.mxu0 %v234
    %294 = vmatpush.msra.mxu0 %v230
    %295 = vmatpush.msra.mxu0 %v226
    %296 = vmatpush.msra.mxu0 %v222
    %297 = vmatpush.msra.mxu0 %v218
    %298 = vmatpush.msra.mxu0 %v214
    %299 = vmatpush.msra.mxu0 %v210
    %300 = vmatmul.f32.gmra.mxu0 %v187
    %v301 = vpop.f32.mrf.mxu0
    %v302 = vadd.f32 %v276, %v301
    %303 = vmatmul.f32.gmra.mxu0 %v190
    %v304 = vpop.f32.mrf.mxu0
    %v305 = vadd.f32 %v276, %v304
    %306 = vmatmul.f32.gmra.mxu0 %v193
    %v307 = vpop.f32.mrf.mxu0
    %v308 = vadd.f32 %v276, %v307
    %309 = vmatmul.f32.gmra.mxu0 %v196
    %v310 = vpop.f32.mrf.mxu0
    %v311 = vadd.f32 %v276, %v310
    %312 = vmatmul.f32.gmra.mxu0 %v199
    %v313 = vpop.f32.mrf.mxu0
    %v314 = vadd.f32 %v276, %v313
    %315 = vmatmul.f32.gmra.mxu0 %v202
    %v316 = vpop.f32.mrf.mxu0
    %v317 = vadd.f32 %v276, %v316
    %318 = vmatmul.f32.gmra.mxu0 %v205
    %v319 = vpop.f32.mrf.mxu0
    %v320 = vadd.f32 %v276, %v319
    %321 = vmatmul.f32.gmra.mxu0 %v208
    %v322 = vpop.f32.mrf.mxu0
    %v323 = vadd.f32 %v276, %v322
    %324 = vdwg.mxu0
    %325 = vmatpush.msra.mxu0 %v271
    %326 = vmatpush.msra.mxu0 %v267
    %327 = vmatpush.msra.mxu0 %v263
    %328 = vmatpush.msra.mxu0 %v259
    %329 = vmatpush.msra.mxu0 %v255
    %330 = vmatpush.msra.mxu0 %v251
    %331 = vmatpush.msra.mxu0 %v247
    %332 = vmatpush.msra.mxu0 %v243
    %333 = vmatpush.msra.mxu0 %v239
    %334 = vmatpush.msra.mxu0 %v235
    %335 = vmatpush.msra.mxu0 %v231
    %336 = vmatpush.msra.mxu0 %v227
    %337 = vmatpush.msra.mxu0 %v223
    %338 = vmatpush.msra.mxu0 %v219
    %339 = vmatpush.msra.mxu0 %v215
    %340 = vmatpush.msra.mxu0 %v211
    %341 = vmatmul.f32.gmra.mxu0 %v187
    %v342 = vpop.f32.mrf.mxu0
    %v343 = vadd.f32 %v277, %v342
    %344 = vmatmul.f32.gmra.mxu0 %v190
    %v345 = vpop.f32.mrf.mxu0
    %v346 = vadd.f32 %v277, %v345
    %347 = vmatmul.f32.gmra.mxu0 %v193
    %v348 = vpop.f32.mrf.mxu0
    %v349 = vadd.f32 %v277, %v348
    %350 = vmatmul.f32.gmra.mxu0 %v196
    %v351 = vpop.f32.mrf.mxu0
    %v352 = vadd.f32 %v277, %v351
    %353 = vmatmul.f32.gmra.mxu0 %v199
    %v354 = vpop.f32.mrf.mxu0
    %v355 = vadd.f32 %v277, %v354
    %356 = vmatmul.f32.gmra.mxu0 %v202
    %v357 = vpop.f32.mrf.mxu0
    %v358 = vadd.f32 %v277, %v357
    %359 = vmatmul.f32.gmra.mxu0 %v205
    %v360 = vpop.f32.mrf.mxu0
    %v361 = vadd.f32 %v277, %v360
    %362 = vmatmul.f32.gmra.mxu0 %v208
    %v363 = vpop.f32.mrf.mxu0
    %v364 = vadd.f32 %v277, %v363
    %365 = vdwg.mxu0
    %366 = vmatpush.msra.mxu0 %v272
    %367 = vmatpush.msra.mxu0 %v268
    %368 = vmatpush.msra.mxu0 %v264
    %369 = vmatpush.msra.mxu0 %v260
    %370 = vmatpush.msra.mxu0 %v256
    %371 = vmatpush.msra.mxu0 %v252
    %372 = vmatpush.msra.mxu0 %v248
    %373 = vmatpush.msra.mxu0 %v244
    %374 = vmatpush.msra.mxu0 %v240
    %375 = vmatpush.msra.mxu0 %v236
    %376 = vmatpush.msra.mxu0 %v232
    %377 = vmatpush.msra.mxu0 %v228
    %378 = vmatpush.msra.mxu0 %v224
    %379 = vmatpush.msra.mxu0 %v220
    %380 = vmatpush.msra.mxu0 %v216
    %381 = vmatpush.msra.mxu0 %v212
    %382 = vmatmul.f32.gmra.mxu0 %v187
    %v383 = vpop.f32.mrf.mxu0
    %v384 = vadd.f32 %v278, %v383
    %385 = vmatmul.f32.gmra.mxu0 %v190
    %v386 = vpop.f32.mrf.mxu0
    %v387 = vadd.f32 %v278, %v386
    %388 = vmatmul.f32.gmra.mxu0 %v193
    %v389 = vpop.f32.mrf.mxu0
    %v390 = vadd.f32 %v278, %v389
    %391 = vmatmul.f32.gmra.mxu0 %v196
    %v392 = vpop.f32.mrf.mxu0
    %v393 = vadd.f32 %v278, %v392
    %394 = vmatmul.f32.gmra.mxu0 %v199
    %v395 = vpop.f32.mrf.mxu0
    %v396 = vadd.f32 %v278, %v395
    %397 = vmatmul.f32.gmra.mxu0 %v202
    %v398 = vpop.f32.mrf.mxu0
    %v399 = vadd.f32 %v278, %v398
    %400 = vmatmul.f32.gmra.mxu0 %v205
    %v401 = vpop.f32.mrf.mxu0
    %v402 = vadd.f32 %v278, %v401
    %403 = vmatmul.f32.gmra.mxu0 %v208
    %v404 = vpop.f32.mrf.mxu0
    %v405 = vadd.f32 %v278, %v404
    %406 = vdwg.mxu0
    %407 = vmatpush.msra.mxu0 %v273
    %408 = vmatpush.msra.mxu0 %v269
    %409 = vmatpush.msra.mxu0 %v265
    %410 = vmatpush.msra.mxu0 %v261
    %411 = vmatpush.msra.mxu0 %v257
    %412 = vmatpush.msra.mxu0 %v253
    %413 = vmatpush.msra.mxu0 %v249
    %414 = vmatpush.msra.mxu0 %v245
    %415 = vmatpush.msra.mxu0 %v241
    %416 = vmatpush.msra.mxu0 %v237
    %417 = vmatpush.msra.mxu0 %v233
    %418 = vmatpush.msra.mxu0 %v229
    %419 = vmatpush.msra.mxu0 %v225
    %420 = vmatpush.msra.mxu0 %v221
    %421 = vmatpush.msra.mxu0 %v217
    %422 = vmatpush.msra.mxu0 %v213
    %423 = vmatmul.f32.gmra.mxu0 %v187
    %v424 = vpop.f32.mrf.mxu0
    %v425 = vadd.f32 %v279, %v424
    %426 = vmatmul.f32.gmra.mxu0 %v190
    %v427 = vpop.f32.mrf.mxu0
    %v428 = vadd.f32 %v279, %v427
    %429 = vmatmul.f32.gmra.mxu0 %v193
    %v430 = vpop.f32.mrf.mxu0
    %v431 = vadd.f32 %v279, %v430
    %432 = vmatmul.f32.gmra.mxu0 %v196
    %v433 = vpop.f32.mrf.mxu0
    %v434 = vadd.f32 %v279, %v433
    %435 = vmatmul.f32.gmra.mxu0 %v199
    %v436 = vpop.f32.mrf.mxu0
    %v437 = vadd.f32 %v279, %v436
    %438 = vmatmul.f32.gmra.mxu0 %v202
    %v439 = vpop.f32.mrf.mxu0
    %v440 = vadd.f32 %v279, %v439
    %441 = vmatmul.f32.gmra.mxu0 %v205
    %v442 = vpop.f32.mrf.mxu0
    %v443 = vadd.f32 %v279, %v442
    %444 = vmatmul.f32.gmra.mxu0 %v208
    %v445 = vpop.f32.mrf.mxu0
    %v446 = vadd.f32 %v279, %v445
    %447 = vdwg.mxu0
    %448 = vst [vmem:[#allocation2] sm:$0xff] %v302
    %449 = vst [vmem:[#allocation2 + $0x8] sm:$0xff] %v343
    %450 = vst [vmem:[#allocation2 + $0x10] sm:$0xff] %v384
    %451 = vst [vmem:[#allocation2 + $0x18] sm:$0xff] %v425
    %452 = vst [vmem:[#allocation2 + $0x20] sm:$0xff] %v305
    %453 = vst [vmem:[#allocation2 + $0x28] sm:$0xff] %v346
    %454 = vst [vmem:[#allocation2 + $0x30] sm:$0xff] %v387
    %455 = vst [vmem:[#allocation2 + $0x38] sm:$0xff] %v428
    %456 = vst [vmem:[#allocation2 + $0x40] sm:$0xff] %v308
    %457 = vst [vmem:[#allocation2 + $0x48] sm:$0xff] %v349
    %458 = vst [vmem:[#allocation2 + $0x50] sm:$0xff] %v390
    %459 = vst [vmem:[#allocation2 + $0x58] sm:$0xff] %v431
    %460 = vst [vmem:[#allocation2 + $0x60] sm:$0xff] %v311
    %461 = vst [vmem:[#allocation2 + $0x68] sm:$0xff] %v352
    %462 = vst [vmem:[#allocation2 + $0x70] sm:$0xff] %v393
    %463 = vst [vmem:[#allocation2 + $0x78] sm:$0xff] %v434
    %464 = vst [vmem:[#allocation2 + $0x80] sm:$0xff] %v314
    %465 = vst [vmem:[#allocation2 + $0x88] sm:$0xff] %v355
    %466 = vst [vmem:[#allocation2 + $0x90] sm:$0xff] %v396
    %467 = vst [vmem:[#allocation2 + $0x98] sm:$0xff] %v437
    %468 = vst [vmem:[#allocation2 + $0xa0] sm:$0xff] %v317
    %469 = vst [vmem:[#allocation2 + $0xa8] sm:$0xff] %v358
    %470 = vst [vmem:[#allocation2 + $0xb0] sm:$0xff] %v399
    %471 = vst [vmem:[#allocation2 + $0xb8] sm:$0xff] %v440
    %472 = vst [vmem:[#allocation2 + $0xc0] sm:$0xff] %v320
    %473 = vst [vmem:[#allocation2 + $0xc8] sm:$0xff] %v361
    %474 = vst [vmem:[#allocation2 + $0xd0] sm:$0xff] %v402
    %475 = vst [vmem:[#allocation2 + $0xd8] sm:$0xff] %v443
    %476 = vst [vmem:[#allocation2 + $0xe0] sm:$0xff] %v323
    %477 = vst [vmem:[#allocation2 + $0xe8] sm:$0xff] %v364
    %478 = vst [vmem:[#allocation2 + $0xf0] sm:$0xff] %v405
    %479 = vst [vmem:[#allocation2 + $0xf8] sm:$0xff] %v446
    %v480 = vld [vmem:[#allocation6] sm:$0xff]
    %v481 = vld [vmem:[#allocation6 + $0x8] sm:$0xff]
    %v482 = vld [vmem:[#allocation6 + $0x10] sm:$0xff]
    %v483 = vld [vmem:[#allocation6 + $0x18] sm:$0xff]
    %v484 = vld [vmem:[#allocation6 + $0x20] sm:$0xff]
    %v485 = vld [vmem:[#allocation6 + $0x28] sm:$0xff]
    %v486 = vld [vmem:[#allocation6 + $0x30] sm:$0xff]
    %v487 = vld [vmem:[#allocation6 + $0x38] sm:$0xff]
    %v488 = vld [vmem:[#allocation6 + $0x40] sm:$0xff]
    %v489 = vld [vmem:[#allocation6 + $0x48] sm:$0xff]
    %v490 = vld [vmem:[#allocation6 + $0x50] sm:$0xff]
    %v491 = vld [vmem:[#allocation6 + $0x58] sm:$0xff]
    %v492 = vld [vmem:[#allocation6 + $0x60] sm:$0xff]
    %v493 = vld [vmem:[#allocation6 + $0x68] sm:$0xff]
    %v494 = vld [vmem:[#allocation6 + $0x70] sm:$0xff]
    %v495 = vld [vmem:[#allocation6 + $0x78] sm:$0xff]
    %v496 = vld [vmem:[#allocation6 + $0x80] sm:$0xff]
    %v497 = vld [vmem:[#allocation6 + $0x88] sm:$0xff]
    %v498 = vld [vmem:[#allocation6 + $0x90] sm:$0xff]
    %v499 = vld [vmem:[#allocation6 + $0x98] sm:$0xff]
    %v500 = vld [vmem:[#allocation6 + $0xa0] sm:$0xff]
    %v501 = vld [vmem:[#allocation6 + $0xa8] sm:$0xff]
    %v502 = vld [vmem:[#allocation6 + $0xb0] sm:$0xff]
    %v503 = vld [vmem:[#allocation6 + $0xb8] sm:$0xff]
    %v504 = vld [vmem:[#allocation6 + $0xc0] sm:$0xff]
    %v505 = vld [vmem:[#allocation6 + $0xc8] sm:$0xff]
    %v506 = vld [vmem:[#allocation6 + $0xd0] sm:$0xff]
    %v507 = vld [vmem:[#allocation6 + $0xd8] sm:$0xff]
    %v508 = vld [vmem:[#allocation6 + $0xe0] sm:$0xff]
    %v509 = vld [vmem:[#allocation6 + $0xe8] sm:$0xff]
    %v510 = vld [vmem:[#allocation6 + $0xf0] sm:$0xff]
    %v511 = vld [vmem:[#allocation6 + $0xf8] sm:$0xff]
    %v512 = vld [vmem:[#allocation6 + $0x100] sm:$0xff]
    %v513 = vld [vmem:[#allocation6 + $0x108] sm:$0xff]
    %v514 = vld [vmem:[#allocation6 + $0x110] sm:$0xff]
    %v515 = vld [vmem:[#allocation6 + $0x118] sm:$0xff]
    %v516 = vld [vmem:[#allocation6 + $0x120] sm:$0xff]
    %v517 = vld [vmem:[#allocation6 + $0x128] sm:$0xff]
    %v518 = vld [vmem:[#allocation6 + $0x130] sm:$0xff]
    %v519 = vld [vmem:[#allocation6 + $0x138] sm:$0xff]
    %v520 = vld [vmem:[#allocation6 + $0x140] sm:$0xff]
    %v521 = vld [vmem:[#allocation6 + $0x148] sm:$0xff]
    %v522 = vld [vmem:[#allocation6 + $0x150] sm:$0xff]
    %v523 = vld [vmem:[#allocation6 + $0x158] sm:$0xff]
    %v524 = vld [vmem:[#allocation6 + $0x160] sm:$0xff]
    %v525 = vld [vmem:[#allocation6 + $0x168] sm:$0xff]
    %v526 = vld [vmem:[#allocation6 + $0x170] sm:$0xff]
    %v527 = vld [vmem:[#allocation6 + $0x178] sm:$0xff]
    %v528 = vld [vmem:[#allocation6 + $0x180] sm:$0xff]
    %v529 = vld [vmem:[#allocation6 + $0x188] sm:$0xff]
    %v530 = vld [vmem:[#allocation6 + $0x190] sm:$0xff]
    %v531 = vld [vmem:[#allocation6 + $0x198] sm:$0xff]
    %v532 = vld [vmem:[#allocation6 + $0x1a0] sm:$0xff]
    %v533 = vld [vmem:[#allocation6 + $0x1a8] sm:$0xff]
    %v534 = vld [vmem:[#allocation6 + $0x1b0] sm:$0xff]
    %v535 = vld [vmem:[#allocation6 + $0x1b8] sm:$0xff]
    %v536 = vld [vmem:[#allocation6 + $0x1c0] sm:$0xff]
    %v537 = vld [vmem:[#allocation6 + $0x1c8] sm:$0xff]
    %v538 = vld [vmem:[#allocation6 + $0x1d0] sm:$0xff]
    %v539 = vld [vmem:[#allocation6 + $0x1d8] sm:$0xff]
    %v540 = vld [vmem:[#allocation6 + $0x1e0] sm:$0xff]
    %v541 = vld [vmem:[#allocation6 + $0x1e8] sm:$0xff]
    %v542 = vld [vmem:[#allocation6 + $0x1f0] sm:$0xff]
    %v543 = vld [vmem:[#allocation6 + $0x1f8] sm:$0xff]
    %v544 = vld [vmem:[#allocation2] sm:$0xff]
    %v545 = vld [vmem:[#allocation2 + $0x8] sm:$0xff]
    %v546 = vld [vmem:[#allocation2 + $0x10] sm:$0xff]
    %v547 = vld [vmem:[#allocation2 + $0x18] sm:$0xff]
    %548 = vmatpush.msra.mxu0 %v540
    %549 = vmatpush.msra.mxu0 %v536
    %550 = vmatpush.msra.mxu0 %v532
    %551 = vmatpush.msra.mxu0 %v528
    %552 = vmatpush.msra.mxu0 %v524
    %553 = vmatpush.msra.mxu0 %v520
    %554 = vmatpush.msra.mxu0 %v516
    %555 = vmatpush.msra.mxu0 %v512
    %556 = vmatpush.msra.mxu0 %v508
    %557 = vmatpush.msra.mxu0 %v504
    %558 = vmatpush.msra.mxu0 %v500
    %559 = vmatpush.msra.mxu0 %v496
    %560 = vmatpush.msra.mxu0 %v492
    %561 = vmatpush.msra.mxu0 %v488
    %562 = vmatpush.msra.mxu0 %v484
    %563 = vmatpush.msra.mxu0 %v480
    %564 = vmatmul.f32.gmra.mxu0 0.0
    %v565 = vpop.f32.mrf.mxu0
    %v566 = vadd.f32 0.0, %v565
    %567 = vdwg.mxu0
    %568 = vmatpush.msra.mxu0 %v541
    %569 = vmatpush.msra.mxu0 %v537
    %570 = vmatpush.msra.mxu0 %v533
    %571 = vmatpush.msra.mxu0 %v529
    %572 = vmatpush.msra.mxu0 %v525
    %573 = vmatpush.msra.mxu0 %v521
    %574 = vmatpush.msra.mxu0 %v517
    %575 = vmatpush.msra.mxu0 %v513
    %576 = vmatpush.msra.mxu0 %v509
    %577 = vmatpush.msra.mxu0 %v505
    %578 = vmatpush.msra.mxu0 %v501
    %579 = vmatpush.msra.mxu0 %v497
    %580 = vmatpush.msra.mxu0 %v493
    %581 = vmatpush.msra.mxu0 %v489
    %582 = vmatpush.msra.mxu0 %v485
    %583 = vmatpush.msra.mxu0 %v481
    %584 = vmatmul.f32.gmra.mxu0 0.0
    %v585 = vpop.f32.mrf.mxu0
    %v586 = vadd.f32 0.0, %v585
    %587 = vdwg.mxu0
    %588 = vmatpush.msra.mxu0 %v542
    %589 = vmatpush.msra.mxu0 %v538
    %590 = vmatpush.msra.mxu0 %v534
    %591 = vmatpush.msra.mxu0 %v530
    %592 = vmatpush.msra.mxu0 %v526
    %593 = vmatpush.msra.mxu0 %v522
    %594 = vmatpush.msra.mxu0 %v518
    %595 = vmatpush.msra.mxu0 %v514
    %596 = vmatpush.msra.mxu0 %v510
    %597 = vmatpush.msra.mxu0 %v506
    %598 = vmatpush.msra.mxu0 %v502
    %599 = vmatpush.msra.mxu0 %v498
    %600 = vmatpush.msra.mxu0 %v494
    %601 = vmatpush.msra.mxu0 %v490
    %602 = vmatpush.msra.mxu0 %v486
    %603 = vmatpush.msra.mxu0 %v482
    %604 = vmatmul.f32.gmra.mxu0 0.0
    %v605 = vpop.f32.mrf.mxu0
    %v606 = vadd.f32 0.0, %v605
    %607 = vdwg.mxu0
    %608 = vmatpush.msra.mxu0 %v543
    %609 = vmatpush.msra.mxu0 %v539
    %610 = vmatpush.msra.mxu0 %v535
    %611 = vmatpush.msra.mxu0 %v531
    %612 = vmatpush.msra.mxu0 %v527
    %613 = vmatpush.msra.mxu0 %v523
    %614 = vmatpush.msra.mxu0 %v519
    %615 = vmatpush.msra.mxu0 %v515
    %616 = vmatpush.msra.mxu0 %v511
    %617 = vmatpush.msra.mxu0 %v507
    %618 = vmatpush.msra.mxu0 %v503
    %619 = vmatpush.msra.mxu0 %v499
    %620 = vmatpush.msra.mxu0 %v495
    %621 = vmatpush.msra.mxu0 %v491
    %622 = vmatpush.msra.mxu0 %v487
    %623 = vmatpush.msra.mxu0 %v483
    %624 = vmatmul.f32.gmra.mxu0 0.0
    %v625 = vpop.f32.mrf.mxu0
    %v626 = vadd.f32 0.0, %v625
    %627 = vdwg.mxu0
    %v628 = vadd.f32 %v544, %v566
    %v629 = vadd.f32 %v545, %v586
    %v630 = vadd.f32 %v546, %v606
    %v631 = vadd.f32 %v547, %v626
    %v632 = vxor.u32 %v628, 2147483648
    %v633 = vmul.f32 %v632, 1.442695
    %v634 = vpow.pop %v633
    %v635 = vadd.f32 %v634, 1.0
    %v636 = vrcp.pop %v635
    %v637 = vmul.f32 %v635, %v636
    %v638 = vsub.f32 1.0, %v637
    %v639 = vmul.f32 %v636, %v638
    %v640 = vadd.f32 %v636, %v639
    %vm641 = vweird.f32 %v635
    %vm642 = vweird.f32 %v636
    %vm643 = vmor %vm641, %vm642
    %v644 = vsel %vm643, %v636, %v640
    %v645 = vand.u32 2147483647, %v635
    %vm646 = vcmp.eq.f32.partialorder %v645, 8.507059e+37
    %v647 = vand.u32 %v635, 2147483648
    %v648 = vor.u32 1.1754944e-38, %v647
    %v649 = vsel %vm646, %v648, %v644
    %v650 = vmul.f32 1.0, %v649
    %v651 = vxor.u32 %v629, 2147483648
    %v652 = vmul.f32 %v651, 1.442695
    %v653 = vpow.pop %v652
    %v654 = vadd.f32 %v653, 1.0
    %v655 = vrcp.pop %v654
    %v656 = vmul.f32 %v654, %v655
    %v657 = vsub.f32 1.0, %v656
    %v658 = vmul.f32 %v655, %v657
    %v659 = vadd.f32 %v655, %v658
    %vm660 = vweird.f32 %v654
    %vm661 = vweird.f32 %v655
    %vm662 = vmor %vm660, %vm661
    %v663 = vsel %vm662, %v655, %v659
    %v664 = vand.u32 2147483647, %v654
    %vm665 = vcmp.eq.f32.partialorder %v664, 8.507059e+37
    %v666 = vand.u32 %v654, 2147483648
    %v667 = vor.u32 1.1754944e-38, %v666
    %v668 = vsel %vm665, %v667, %v663
    %v669 = vmul.f32 1.0, %v668
    %v670 = vtanh.pop %v630
    %v671 = vxor.u32 %v631, 2147483648
    %v672 = vmul.f32 %v671, 1.442695
    %v673 = vpow.pop %v672
    %v674 = vadd.f32 %v673, 1.0
    %v675 = vrcp.pop %v674
    %v676 = vmul.f32 %v674, %v675
    %v677 = vsub.f32 1.0, %v676
    %v678 = vmul.f32 %v675, %v677
    %v679 = vadd.f32 %v675, %v678
    %vm680 = vweird.f32 %v674
    %vm681 = vweird.f32 %v675
    %vm682 = vmor %vm680, %vm681
    %v683 = vsel %vm682, %v675, %v679
    %v684 = vand.u32 2147483647, %v674
    %vm685 = vcmp.eq.f32.partialorder %v684, 8.507059e+37
    %v686 = vand.u32 %v674, 2147483648
    %v687 = vor.u32 1.1754944e-38, %v686
    %v688 = vsel %vm685, %v687, %v683
    %v689 = vmul.f32 1.0, %v688
    %v690 = vmul.f32 %v669, 0.0
    %v691 = vmul.f32 %v650, %v670
    %v692 = vadd.f32 %v690, %v691
    %v693 = vtanh.pop %v692
    %v694 = vmul.f32 %v689, %v693
    %v695 = vld [vmem:[#allocation2 + $0x20] sm:$0xff]
    %v696 = vld [vmem:[#allocation2 + $0x28] sm:$0xff]
    %v697 = vld [vmem:[#allocation2 + $0x30] sm:$0xff]
    %v698 = vld [vmem:[#allocation2 + $0x38] sm:$0xff]
    %699 = vmatpush.msra.mxu0 %v540
    %700 = vmatpush.msra.mxu0 %v536
    %701 = vmatpush.msra.mxu0 %v532
    %702 = vmatpush.msra.mxu0 %v528
    %703 = vmatpush.msra.mxu0 %v524
    %704 = vmatpush.msra.mxu0 %v520
    %705 = vmatpush.msra.mxu0 %v516
    %706 = vmatpush.msra.mxu0 %v512
    %707 = vmatpush.msra.mxu0 %v508
    %708 = vmatpush.msra.mxu0 %v504
    %709 = vmatpush.msra.mxu0 %v500
    %710 = vmatpush.msra.mxu0 %v496
    %711 = vmatpush.msra.mxu0 %v492
    %712 = vmatpush.msra.mxu0 %v488
    %713 = vmatpush.msra.mxu0 %v484
    %714 = vmatpush.msra.mxu0 %v480
    %715 = vmatmul.f32.gmra.mxu0 %v694
    %v716 = vpop.f32.mrf.mxu0
    %v717 = vadd.f32 0.0, %v716
    %718 = vdwg.mxu0
    %719 = vmatpush.msra.mxu0 %v541
    %720 = vmatpush.msra.mxu0 %v537
    %721 = vmatpush.msra.mxu0 %v533
    %722 = vmatpush.msra.mxu0 %v529
    %723 = vmatpush.msra.mxu0 %v525
    %724 = vmatpush.msra.mxu0 %v521
    %725 = vmatpush.msra.mxu0 %v517
    %726 = vmatpush.msra.mxu0 %v513
    %727 = vmatpush.msra.mxu0 %v509
    %728 = vmatpush.msra.mxu0 %v505
    %729 = vmatpush.msra.mxu0 %v501
    %730 = vmatpush.msra.mxu0 %v497
    %731 = vmatpush.msra.mxu0 %v493
    %732 = vmatpush.msra.mxu0 %v489
    %733 = vmatpush.msra.mxu0 %v485
    %734 = vmatpush.msra.mxu0 %v481
    %735 = vmatmul.f32.gmra.mxu0 %v694
    %v736 = vpop.f32.mrf.mxu0
    %v737 = vadd.f32 0.0, %v736
    %738 = vdwg.mxu0
    %739 = vmatpush.msra.mxu0 %v542
    %740 = vmatpush.msra.mxu0 %v538
    %741 = vmatpush.msra.mxu0 %v534
    %742 = vmatpush.msra.mxu0 %v530
    %743 = vmatpush.msra.mxu0 %v526
    %744 = vmatpush.msra.mxu0 %v522
    %745 = vmatpush.msra.mxu0 %v518
    %746 = vmatpush.msra.mxu0 %v514
    %747 = vmatpush.msra.mxu0 %v510
    %748 = vmatpush.msra.mxu0 %v506
    %749 = vmatpush.msra.mxu0 %v502
    %750 = vmatpush.msra.mxu0 %v498
    %751 = vmatpush.msra.mxu0 %v494
    %752 = vmatpush.msra.mxu0 %v490
    %753 = vmatpush.msra.mxu0 %v486
    %754 = vmatpush.msra.mxu0 %v482
    %755 = vmatmul.f32.gmra.mxu0 %v694
    %v756 = vpop.f32.mrf.mxu0
    %v757 = vadd.f32 0.0, %v756
    %758 = vdwg.mxu0
    %759 = vmatpush.msra.mxu0 %v543
    %760 = vmatpush.msra.mxu0 %v539
    %761 = vmatpush.msra.mxu0 %v535
    %762 = vmatpush.msra.mxu0 %v531
    %763 = vmatpush.msra.mxu0 %v527
    %764 = vmatpush.msra.mxu0 %v523
    %765 = vmatpush.msra.mxu0 %v519
    %766 = vmatpush.msra.mxu0 %v515
    %767 = vmatpush.msra.mxu0 %v511
    %768 = vmatpush.msra.mxu0 %v507
    %769 = vmatpush.msra.mxu0 %v503
    %770 = vmatpush.msra.mxu0 %v499
    %771 = vmatpush.msra.mxu0 %v495
    %772 = vmatpush.msra.mxu0 %v491
    %773 = vmatpush.msra.mxu0 %v487
    %774 = vmatpush.msra.mxu0 %v483
    %775 = vmatmul.f32.gmra.mxu0 %v694
    %v776 = vpop.f32.mrf.mxu0
    %v777 = vadd.f32 0.0, %v776
    %778 = vdwg.mxu0
    %v779 = vadd.f32 %v695, %v717
    %v780 = vadd.f32 %v696, %v737
    %v781 = vadd.f32 %v697, %v757
    %v782 = vadd.f32 %v698, %v777
    %v783 = vxor.u32 %v779, 2147483648
    %v784 = vmul.f32 %v783, 1.442695
    %v785 = vpow.pop %v784
    %v786 = vadd.f32 %v785, 1.0
    %v787 = vrcp.pop %v786
    %v788 = vmul.f32 %v786, %v787
    %v789 = vsub.f32 1.0, %v788
    %v790 = vmul.f32 %v787, %v789
    %v791 = vadd.f32 %v787, %v790
    %vm792 = vweird.f32 %v786
    %vm793 = vweird.f32 %v787
    %vm794 = vmor %vm792, %vm793
    %v795 = vsel %vm794, %v787, %v791
    %v796 = vand.u32 2147483647, %v786
    %vm797 = vcmp.eq.f32.partialorder %v796, 8.507059e+37
    %v798 = vand.u32 %v786, 2147483648
    %v799 = vor.u32 1.1754944e-38, %v798
    %v800 = vsel %vm797, %v799, %v795
    %v801 = vmul.f32 1.0, %v800
    %v802 = vxor.u32 %v780, 2147483648
    %v803 = vmul.f32 %v802, 1.442695
    %v804 = vpow.pop %v803
    %v805 = vadd.f32 %v804, 1.0
    %v806 = vrcp.pop %v805
    %v807 = vmul.f32 %v805, %v806
    %v808 = vsub.f32 1.0, %v807
    %v809 = vmul.f32 %v806, %v808
    %v810 = vadd.f32 %v806, %v809
    %vm811 = vweird.f32 %v805
    %vm812 = vweird.f32 %v806
    %vm813 = vmor %vm811, %vm812
    %v814 = vsel %vm813, %v806, %v810
    %v815 = vand.u32 2147483647, %v805
    %vm816 = vcmp.eq.f32.partialorder %v815, 8.507059e+37
    %v817 = vand.u32 %v805, 2147483648
    %v818 = vor.u32 1.1754944e-38, %v817
    %v819 = vsel %vm816, %v818, %v814
    %v820 = vmul.f32 1.0, %v819
    %v821 = vtanh.pop %v781
    %v822 = vxor.u32 %v782, 2147483648
    %v823 = vmul.f32 %v822, 1.442695
    %v824 = vpow.pop %v823
    %v825 = vadd.f32 %v824, 1.0
    %v826 = vrcp.pop %v825
    %v827 = vmul.f32 %v825, %v826
    %v828 = vsub.f32 1.0, %v827
    %v829 = vmul.f32 %v826, %v828
    %v830 = vadd.f32 %v826, %v829
    %vm831 = vweird.f32 %v825
    %vm832 = vweird.f32 %v826
    %vm833 = vmor %vm831, %vm832
    %v834 = vsel %vm833, %v826, %v830
    %v835 = vand.u32 2147483647, %v825
    %vm836 = vcmp.eq.f32.partialorder %v835, 8.507059e+37
    %v837 = vand.u32 %v825, 2147483648
    %v838 = vor.u32 1.1754944e-38, %v837
    %v839 = vsel %vm836, %v838, %v834
    %v840 = vmul.f32 1.0, %v839
    %v841 = vmul.f32 %v820, %v692
    %v842 = vmul.f32 %v801, %v821
    %v843 = vadd.f32 %v841, %v842
    %v844 = vtanh.pop %v843
    %v845 = vmul.f32 %v840, %v844
    %v846 = vld [vmem:[#allocation2 + $0x40] sm:$0xff]
    %v847 = vld [vmem:[#allocation2 + $0x48] sm:$0xff]
    %v848 = vld [vmem:[#allocation2 + $0x50] sm:$0xff]
    %v849 = vld [vmem:[#allocation2 + $0x58] sm:$0xff]
    %850 = vmatpush.msra.mxu0 %v540
    %851 = vmatpush.msra.mxu0 %v536
    %852 = vmatpush.msra.mxu0 %v532
    %853 = vmatpush.msra.mxu0 %v528
    %854 = vmatpush.msra.mxu0 %v524
    %855 = vmatpush.msra.mxu0 %v520
    %856 = vmatpush.msra.mxu0 %v516
    %857 = vmatpush.msra.mxu0 %v512
    %858 = vmatpush.msra.mxu0 %v508
    %859 = vmatpush.msra.mxu0 %v504
    %860 = vmatpush.msra.mxu0 %v500
    %861 = vmatpush.msra.mxu0 %v496
    %862 = vmatpush.msra.mxu0 %v492
    %863 = vmatpush.msra.mxu0 %v488
    %864 = vmatpush.msra.mxu0 %v484
    %865 = vmatpush.msra.mxu0 %v480
    %866 = vmatmul.f32.gmra.mxu0 %v845
    %v867 = vpop.f32.mrf.mxu0
    %v868 = vadd.f32 0.0, %v867
    %869 = vdwg.mxu0
    %870 = vmatpush.msra.mxu0 %v541
    %871 = vmatpush.msra.mxu0 %v537
    %872 = vmatpush.msra.mxu0 %v533
    %873 = vmatpush.msra.mxu0 %v529
    %874 = vmatpush.msra.mxu0 %v525
    %875 = vmatpush.msra.mxu0 %v521
    %876 = vmatpush.msra.mxu0 %v517
    %877 = vmatpush.msra.mxu0 %v513
    %878 = vmatpush.msra.mxu0 %v509
    %879 = vmatpush.msra.mxu0 %v505
    %880 = vmatpush.msra.mxu0 %v501
    %881 = vmatpush.msra.mxu0 %v497
    %882 = vmatpush.msra.mxu0 %v493
    %883 = vmatpush.msra.mxu0 %v489
    %884 = vmatpush.msra.mxu0 %v485
    %885 = vmatpush.msra.mxu0 %v481
    %886 = vmatmul.f32.gmra.mxu0 %v845
    %v887 = vpop.f32.mrf.mxu0
    %v888 = vadd.f32 0.0, %v887
    %889 = vdwg.mxu0
    %890 = vmatpush.msra.mxu0 %v542
    %891 = vmatpush.msra.mxu0 %v538
    %892 = vmatpush.msra.mxu0 %v534
    %893 = vmatpush.msra.mxu0 %v530
    %894 = vmatpush.msra.mxu0 %v526
    %895 = vmatpush.msra.mxu0 %v522
    %896 = vmatpush.msra.mxu0 %v518
    %897 = vmatpush.msra.mxu0 %v514
    %898 = vmatpush.msra.mxu0 %v510
    %899 = vmatpush.msra.mxu0 %v506
    %900 = vmatpush.msra.mxu0 %v502
    %901 = vmatpush.msra.mxu0 %v498
    %902 = vmatpush.msra.mxu0 %v494
    %903 = vmatpush.msra.mxu0 %v490
    %904 = vmatpush.msra.mxu0 %v486
    %905 = vmatpush.msra.mxu0 %v482
    %906 = vmatmul.f32.gmra.mxu0 %v845
    %v907 = vpop.f32.mrf.mxu0
    %v908 = vadd.f32 0.0, %v907
    %909 = vdwg.mxu0
    %910 = vmatpush.msra.mxu0 %v543
    %911 = vmatpush.msra.mxu0 %v539
    %912 = vmatpush.msra.mxu0 %v535
    %913 = vmatpush.msra.mxu0 %v531
    %914 = vmatpush.msra.mxu0 %v527
    %915 = vmatpush.msra.mxu0 %v523
    %916 = vmatpush.msra.mxu0 %v519
    %917 = vmatpush.msra.mxu0 %v515
    %918 = vmatpush.msra.mxu0 %v511
    %919 = vmatpush.msra.mxu0 %v507
    %920 = vmatpush.msra.mxu0 %v503
    %921 = vmatpush.msra.mxu0 %v499
    %922 = vmatpush.msra.mxu0 %v495
    %923 = vmatpush.msra.mxu0 %v491
    %924 = vmatpush.msra.mxu0 %v487
    %925 = vmatpush.msra.mxu0 %v483
    %926 = vmatmul.f32.gmra.mxu0 %v845
    %v927 = vpop.f32.mrf.mxu0
    %v928 = vadd.f32 0.0, %v927
    %929 = vdwg.mxu0
    %v930 = vadd.f32 %v846, %v868
    %v931 = vadd.f32 %v847, %v888
    %v932 = vadd.f32 %v848, %v908
    %v933 = vadd.f32 %v849, %v928
    %v934 = vxor.u32 %v930, 2147483648
    %v935 = vmul.f32 %v934, 1.442695
    %v936 = vpow.pop %v935
    %v937 = vadd.f32 %v936, 1.0
    %v938 = vrcp.pop %v937
    %v939 = vmul.f32 %v937, %v938
    %v940 = vsub.f32 1.0, %v939
    %v941 = vmul.f32 %v938, %v940
    %v942 = vadd.f32 %v938, %v941
    %vm943 = vweird.f32 %v937
    %vm944 = vweird.f32 %v938
    %vm945 = vmor %vm943, %vm944
    %v946 = vsel %vm945, %v938, %v942
    %v947 = vand.u32 2147483647, %v937
    %vm948 = vcmp.eq.f32.partialorder %v947, 8.507059e+37
    %v949 = vand.u32 %v937, 2147483648
    %v950 = vor.u32 1.1754944e-38, %v949
    %v951 = vsel %vm948, %v950, %v946
    %v952 = vmul.f32 1.0, %v951
    %v953 = vxor.u32 %v931, 2147483648
    %v954 = vmul.f32 %v953, 1.442695
    %v955 = vpow.pop %v954
    %v956 = vadd.f32 %v955, 1.0
    %v957 = vrcp.pop %v956
    %v958 = vmul.f32 %v956, %v957
    %v959 = vsub.f32 1.0, %v958
    %v960 = vmul.f32 %v957, %v959
    %v961 = vadd.f32 %v957, %v960
    %vm962 = vweird.f32 %v956
    %vm963 = vweird.f32 %v957
    %vm964 = vmor %vm962, %vm963
    %v965 = vsel %vm964, %v957, %v961
    %v966 = vand.u32 2147483647, %v956
    %vm967 = vcmp.eq.f32.partialorder %v966, 8.507059e+37
    %v968 = vand.u32 %v956, 2147483648
    %v969 = vor.u32 1.1754944e-38, %v968
    %v970 = vsel %vm967, %v969, %v965
    %v971 = vmul.f32 1.0, %v970
    %v972 = vtanh.pop %v932
    %v973 = vxor.u32 %v933, 2147483648
    %v974 = vmul.f32 %v973, 1.442695
    %v975 = vpow.pop %v974
    %v976 = vadd.f32 %v975, 1.0
    %v977 = vrcp.pop %v976
    %v978 = vmul.f32 %v976, %v977
    %v979 = vsub.f32 1.0, %v978
    %v980 = vmul.f32 %v977, %v979
    %v981 = vadd.f32 %v977, %v980
    %vm982 = vweird.f32 %v976
    %vm983 = vweird.f32 %v977
    %vm984 = vmor %vm982, %vm983
    %v985 = vsel %vm984, %v977, %v981
    %v986 = vand.u32 2147483647, %v976
    %vm987 = vcmp.eq.f32.partialorder %v986, 8.507059e+37
    %v988 = vand.u32 %v976, 2147483648
    %v989 = vor.u32 1.1754944e-38, %v988
    %v990 = vsel %vm987, %v989, %v985
    %v991 = vmul.f32 1.0, %v990
    %v992 = vmul.f32 %v971, %v843
    %v993 = vmul.f32 %v952, %v972
    %v994 = vadd.f32 %v992, %v993
    %v995 = vtanh.pop %v994
    %v996 = vmul.f32 %v991, %v995
    %v997 = vld [vmem:[#allocation2 + $0x60] sm:$0xff]
    %v998 = vld [vmem:[#allocation2 + $0x68] sm:$0xff]
    %v999 = vld [vmem:[#allocation2 + $0x70] sm:$0xff]
    %v1000 = vld [vmem:[#allocation2 + $0x78] sm:$0xff]
    %1001 = vmatpush.msra.mxu0 %v540
    %1002 = vmatpush.msra.mxu0 %v536
    %1003 = vmatpush.msra.mxu0 %v532
    %1004 = vmatpush.msra.mxu0 %v528
    %1005 = vmatpush.msra.mxu0 %v524
    %1006 = vmatpush.msra.mxu0 %v520
    %1007 = vmatpush.msra.mxu0 %v516
    %1008 = vmatpush.msra.mxu0 %v512
    %1009 = vmatpush.msra.mxu0 %v508
    %1010 = vmatpush.msra.mxu0 %v504
    %1011 = vmatpush.msra.mxu0 %v500
    %1012 = vmatpush.msra.mxu0 %v496
    %1013 = vmatpush.msra.mxu0 %v492
    %1014 = vmatpush.msra.mxu0 %v488
    %1015 = vmatpush.msra.mxu0 %v484
    %1016 = vmatpush.msra.mxu0 %v480
    %1017 = vmatmul.f32.gmra.mxu0 %v996
    %v1018 = vpop.f32.mrf.mxu0
    %v1019 = vadd.f32 0.0, %v1018
    %1020 = vdwg.mxu0
    %1021 = vmatpush.msra.mxu0 %v541
    %1022 = vmatpush.msra.mxu0 %v537
    %1023 = vmatpush.msra.mxu0 %v533
    %1024 = vmatpush.msra.mxu0 %v529
    %1025 = vmatpush.msra.mxu0 %v525
    %1026 = vmatpush.msra.mxu0 %v521
    %1027 = vmatpush.msra.mxu0 %v517
    %1028 = vmatpush.msra.mxu0 %v513
    %1029 = vmatpush.msra.mxu0 %v509
    %1030 = vmatpush.msra.mxu0 %v505
    %1031 = vmatpush.msra.mxu0 %v501
    %1032 = vmatpush.msra.mxu0 %v497
    %1033 = vmatpush.msra.mxu0 %v493
    %1034 = vmatpush.msra.mxu0 %v489
    %1035 = vmatpush.msra.mxu0 %v485
    %1036 = vmatpush.msra.mxu0 %v481
    %1037 = vmatmul.f32.gmra.mxu0 %v996
    %v1038 = vpop.f32.mrf.mxu0
    %v1039 = vadd.f32 0.0, %v1038
    %1040 = vdwg.mxu0
    %1041 = vmatpush.msra.mxu0 %v542
    %1042 = vmatpush.msra.mxu0 %v538
    %1043 = vmatpush.msra.mxu0 %v534
    %1044 = vmatpush.msra.mxu0 %v530
    %1045 = vmatpush.msra.mxu0 %v526
    %1046 = vmatpush.msra.mxu0 %v522
    %1047 = vmatpush.msra.mxu0 %v518
    %1048 = vmatpush.msra.mxu0 %v514
    %1049 = vmatpush.msra.mxu0 %v510
    %1050 = vmatpush.msra.mxu0 %v506
    %1051 = vmatpush.msra.mxu0 %v502
    %1052 = vmatpush.msra.mxu0 %v498
    %1053 = vmatpush.msra.mxu0 %v494
    %1054 = vmatpush.msra.mxu0 %v490
    %1055 = vmatpush.msra.mxu0 %v486
    %1056 = vmatpush.msra.mxu0 %v482
    %1057 = vmatmul.f32.gmra.mxu0 %v996
    %v1058 = vpop.f32.mrf.mxu0
    %v1059 = vadd.f32 0.0, %v1058
    %1060 = vdwg.mxu0
    %1061 = vmatpush.msra.mxu0 %v543
    %1062 = vmatpush.msra.mxu0 %v539
    %1063 = vmatpush.msra.mxu0 %v535
    %1064 = vmatpush.msra.mxu0 %v531
    %1065 = vmatpush.msra.mxu0 %v527
    %1066 = vmatpush.msra.mxu0 %v523
    %1067 = vmatpush.msra.mxu0 %v519
    %1068 = vmatpush.msra.mxu0 %v515
    %1069 = vmatpush.msra.mxu0 %v511
    %1070 = vmatpush.msra.mxu0 %v507
    %1071 = vmatpush.msra.mxu0 %v503
    %1072 = vmatpush.msra.mxu0 %v499
    %1073 = vmatpush.msra.mxu0 %v495
    %1074 = vmatpush.msra.mxu0 %v491
    %1075 = vmatpush.msra.mxu0 %v487
    %1076 = vmatpush.msra.mxu0 %v483
    %1077 = vmatmul.f32.gmra.mxu0 %v996
    %v1078 = vpop.f32.mrf.mxu0
    %v1079 = vadd.f32 0.0, %v1078
    %1080 = vdwg.mxu0
    %v1081 = vadd.f32 %v997, %v1019
    %v1082 = vadd.f32 %v998, %v1039
    %v1083 = vadd.f32 %v999, %v1059
    %v1084 = vadd.f32 %v1000, %v1079
    %v1085 = vxor.u32 %v1081, 2147483648
    %v1086 = vmul.f32 %v1085, 1.442695
    %v1087 = vpow.pop %v1086
    %v1088 = vadd.f32 %v1087, 1.0
    %v1089 = vrcp.pop %v1088
    %v1090 = vmul.f32 %v1088, %v1089
    %v1091 = vsub.f32 1.0, %v1090
    %v1092 = vmul.f32 %v1089, %v1091
    %v1093 = vadd.f32 %v1089, %v1092
    %vm1094 = vweird.f32 %v1088
    %vm1095 = vweird.f32 %v1089
    %vm1096 = vmor %vm1094, %vm1095
    %v1097 = vsel %vm1096, %v1089, %v1093
    %v1098 = vand.u32 2147483647, %v1088
    %vm1099 = vcmp.eq.f32.partialorder %v1098, 8.507059e+37
    %v1100 = vand.u32 %v1088, 2147483648
    %v1101 = vor.u32 1.1754944e-38, %v1100
    %v1102 = vsel %vm1099, %v1101, %v1097
    %v1103 = vmul.f32 1.0, %v1102
    %v1104 = vxor.u32 %v1082, 2147483648
    %v1105 = vmul.f32 %v1104, 1.442695
    %v1106 = vpow.pop %v1105
    %v1107 = vadd.f32 %v1106, 1.0
    %v1108 = vrcp.pop %v1107
    %v1109 = vmul.f32 %v1107, %v1108
    %v1110 = vsub.f32 1.0, %v1109
    %v1111 = vmul.f32 %v1108, %v1110
    %v1112 = vadd.f32 %v1108, %v1111
    %vm1113 = vweird.f32 %v1107
    %vm1114 = vweird.f32 %v1108
    %vm1115 = vmor %vm1113, %vm1114
    %v1116 = vsel %vm1115, %v1108, %v1112
    %v1117 = vand.u32 2147483647, %v1107
    %vm1118 = vcmp.eq.f32.partialorder %v1117, 8.507059e+37
    %v1119 = vand.u32 %v1107, 2147483648
    %v1120 = vor.u32 1.1754944e-38, %v1119
    %v1121 = vsel %vm1118, %v1120, %v1116
    %v1122 = vmul.f32 1.0, %v1121
    %v1123 = vtanh.pop %v1083
    %v1124 = vxor.u32 %v1084, 2147483648
    %v1125 = vmul.f32 %v1124, 1.442695
    %v1126 = vpow.pop %v1125
    %v1127 = vadd.f32 %v1126, 1.0
    %v1128 = vrcp.pop %v1127
    %v1129 = vmul.f32 %v1127, %v1128
    %v1130 = vsub.f32 1.0, %v1129
    %v1131 = vmul.f32 %v1128, %v1130
    %v1132 = vadd.f32 %v1128, %v1131
    %vm1133 = vweird.f32 %v1127
    %vm1134 = vweird.f32 %v1128
    %vm1135 = vmor %vm1133, %vm1134
    %v1136 = vsel %vm1135, %v1128, %v1132
    %v1137 = vand.u32 2147483647, %v1127
    %vm1138 = vcmp.eq.f32.partialorder %v1137, 8.507059e+37
    %v1139 = vand.u32 %v1127, 2147483648
    %v1140 = vor.u32 1.1754944e-38, %v1139
    %v1141 = vsel %vm1138, %v1140, %v1136
    %v1142 = vmul.f32 1.0, %v1141
    %v1143 = vmul.f32 %v1122, %v994
    %v1144 = vmul.f32 %v1103, %v1123
    %v1145 = vadd.f32 %v1143, %v1144
    %v1146 = vtanh.pop %v1145
    %v1147 = vmul.f32 %v1142, %v1146
    %v1148 = vld [vmem:[#allocation2 + $0x80] sm:$0xff]
    %v1149 = vld [vmem:[#allocation2 + $0x88] sm:$0xff]
    %v1150 = vld [vmem:[#allocation2 + $0x90] sm:$0xff]
    %v1151 = vld [vmem:[#allocation2 + $0x98] sm:$0xff]
    %1152 = vmatpush.msra.mxu0 %v540
    %1153 = vmatpush.msra.mxu0 %v536
    %1154 = vmatpush.msra.mxu0 %v532
    %1155 = vmatpush.msra.mxu0 %v528
    %1156 = vmatpush.msra.mxu0 %v524
    %1157 = vmatpush.msra.mxu0 %v520
    %1158 = vmatpush.msra.mxu0 %v516
    %1159 = vmatpush.msra.mxu0 %v512
    %1160 = vmatpush.msra.mxu0 %v508
    %1161 = vmatpush.msra.mxu0 %v504
    %1162 = vmatpush.msra.mxu0 %v500
    %1163 = vmatpush.msra.mxu0 %v496
    %1164 = vmatpush.msra.mxu0 %v492
    %1165 = vmatpush.msra.mxu0 %v488
    %1166 = vmatpush.msra.mxu0 %v484
    %1167 = vmatpush.msra.mxu0 %v480
    %1168 = vmatmul.f32.gmra.mxu0 %v1147
    %v1169 = vpop.f32.mrf.mxu0
    %v1170 = vadd.f32 0.0, %v1169
    %1171 = vdwg.mxu0
    %1172 = vmatpush.msra.mxu0 %v541
    %1173 = vmatpush.msra.mxu0 %v537
    %1174 = vmatpush.msra.mxu0 %v533
    %1175 = vmatpush.msra.mxu0 %v529
    %1176 = vmatpush.msra.mxu0 %v525
    %1177 = vmatpush.msra.mxu0 %v521
    %1178 = vmatpush.msra.mxu0 %v517
    %1179 = vmatpush.msra.mxu0 %v513
    %1180 = vmatpush.msra.mxu0 %v509
    %1181 = vmatpush.msra.mxu0 %v505
    %1182 = vmatpush.msra.mxu0 %v501
    %1183 = vmatpush.msra.mxu0 %v497
    %1184 = vmatpush.msra.mxu0 %v493
    %1185 = vmatpush.msra.mxu0 %v489
    %1186 = vmatpush.msra.mxu0 %v485
    %1187 = vmatpush.msra.mxu0 %v481
    %1188 = vmatmul.f32.gmra.mxu0 %v1147
    %v1189 = vpop.f32.mrf.mxu0
    %v1190 = vadd.f32 0.0, %v1189
    %1191 = vdwg.mxu0
    %1192 = vmatpush.msra.mxu0 %v542
    %1193 = vmatpush.msra.mxu0 %v538
    %1194 = vmatpush.msra.mxu0 %v534
    %1195 = vmatpush.msra.mxu0 %v530
    %1196 = vmatpush.msra.mxu0 %v526
    %1197 = vmatpush.msra.mxu0 %v522
    %1198 = vmatpush.msra.mxu0 %v518
    %1199 = vmatpush.msra.mxu0 %v514
    %1200 = vmatpush.msra.mxu0 %v510
    %1201 = vmatpush.msra.mxu0 %v506
    %1202 = vmatpush.msra.mxu0 %v502
    %1203 = vmatpush.msra.mxu0 %v498
    %1204 = vmatpush.msra.mxu0 %v494
    %1205 = vmatpush.msra.mxu0 %v490
    %1206 = vmatpush.msra.mxu0 %v486
    %1207 = vmatpush.msra.mxu0 %v482
    %1208 = vmatmul.f32.gmra.mxu0 %v1147
    %v1209 = vpop.f32.mrf.mxu0
    %v1210 = vadd.f32 0.0, %v1209
    %1211 = vdwg.mxu0
    %1212 = vmatpush.msra.mxu0 %v543
    %1213 = vmatpush.msra.mxu0 %v539
    %1214 = vmatpush.msra.mxu0 %v535
    %1215 = vmatpush.msra.mxu0 %v531
    %1216 = vmatpush.msra.mxu0 %v527
    %1217 = vmatpush.msra.mxu0 %v523
    %1218 = vmatpush.msra.mxu0 %v519
    %1219 = vmatpush.msra.mxu0 %v515
    %1220 = vmatpush.msra.mxu0 %v511
    %1221 = vmatpush.msra.mxu0 %v507
    %1222 = vmatpush.msra.mxu0 %v503
    %1223 = vmatpush.msra.mxu0 %v499
    %1224 = vmatpush.msra.mxu0 %v495
    %1225 = vmatpush.msra.mxu0 %v491
    %1226 = vmatpush.msra.mxu0 %v487
    %1227 = vmatpush.msra.mxu0 %v483
    %1228 = vmatmul.f32.gmra.mxu0 %v1147
    %v1229 = vpop.f32.mrf.mxu0
    %v1230 = vadd.f32 0.0, %v1229
    %1231 = vdwg.mxu0
    %v1232 = vadd.f32 %v1148, %v1170
    %v1233 = vadd.f32 %v1149, %v1190
    %v1234 = vadd.f32 %v1150, %v1210
    %v1235 = vadd.f32 %v1151, %v1230
    %v1236 = vxor.u32 %v1232, 2147483648
    %v1237 = vmul.f32 %v1236, 1.442695
    %v1238 = vpow.pop %v1237
    %v1239 = vadd.f32 %v1238, 1.0
    %v1240 = vrcp.pop %v1239
    %v1241 = vmul.f32 %v1239, %v1240
    %v1242 = vsub.f32 1.0, %v1241
    %v1243 = vmul.f32 %v1240, %v1242
    %v1244 = vadd.f32 %v1240, %v1243
    %vm1245 = vweird.f32 %v1239
    %vm1246 = vweird.f32 %v1240
    %vm1247 = vmor %vm1245, %vm1246
    %v1248 = vsel %vm1247, %v1240, %v1244
    %v1249 = vand.u32 2147483647, %v1239
    %vm1250 = vcmp.eq.f32.partialorder %v1249, 8.507059e+37
    %v1251 = vand.u32 %v1239, 2147483648
    %v1252 = vor.u32 1.1754944e-38, %v1251
    %v1253 = vsel %vm1250, %v1252, %v1248
    %v1254 = vmul.f32 1.0, %v1253
    %v1255 = vxor.u32 %v1233, 2147483648
    %v1256 = vmul.f32 %v1255, 1.442695
    %v1257 = vpow.pop %v1256
    %v1258 = vadd.f32 %v1257, 1.0
    %v1259 = vrcp.pop %v1258
    %v1260 = vmul.f32 %v1258, %v1259
    %v1261 = vsub.f32 1.0, %v1260
    %v1262 = vmul.f32 %v1259, %v1261
    %v1263 = vadd.f32 %v1259, %v1262
    %vm1264 = vweird.f32 %v1258
    %vm1265 = vweird.f32 %v1259
    %vm1266 = vmor %vm1264, %vm1265
    %v1267 = vsel %vm1266, %v1259, %v1263
    %v1268 = vand.u32 2147483647, %v1258
    %vm1269 = vcmp.eq.f32.partialorder %v1268, 8.507059e+37
    %v1270 = vand.u32 %v1258, 2147483648
    %v1271 = vor.u32 1.1754944e-38, %v1270
    %v1272 = vsel %vm1269, %v1271, %v1267
    %v1273 = vmul.f32 1.0, %v1272
    %v1274 = vtanh.pop %v1234
    %v1275 = vxor.u32 %v1235, 2147483648
    %v1276 = vmul.f32 %v1275, 1.442695
    %v1277 = vpow.pop %v1276
    %v1278 = vadd.f32 %v1277, 1.0
    %v1279 = vrcp.pop %v1278
    %v1280 = vmul.f32 %v1278, %v1279
    %v1281 = vsub.f32 1.0, %v1280
    %v1282 = vmul.f32 %v1279, %v1281
    %v1283 = vadd.f32 %v1279, %v1282
    %vm1284 = vweird.f32 %v1278
    %vm1285 = vweird.f32 %v1279
    %vm1286 = vmor %vm1284, %vm1285
    %v1287 = vsel %vm1286, %v1279, %v1283
    %v1288 = vand.u32 2147483647, %v1278
    %vm1289 = vcmp.eq.f32.partialorder %v1288, 8.507059e+37
    %v1290 = vand.u32 %v1278, 2147483648
    %v1291 = vor.u32 1.1754944e-38, %v1290
    %v1292 = vsel %vm1289, %v1291, %v1287
    %v1293 = vmul.f32 1.0, %v1292
    %v1294 = vmul.f32 %v1273, %v1145
    %v1295 = vmul.f32 %v1254, %v1274
    %v1296 = vadd.f32 %v1294, %v1295
    %v1297 = vtanh.pop %v1296
    %v1298 = vmul.f32 %v1293, %v1297
    %v1299 = vld [vmem:[#allocation2 + $0xa0] sm:$0xff]
    %v1300 = vld [vmem:[#allocation2 + $0xa8] sm:$0xff]
    %v1301 = vld [vmem:[#allocation2 + $0xb0] sm:$0xff]
    %v1302 = vld [vmem:[#allocation2 + $0xb8] sm:$0xff]
    %1303 = vmatpush.msra.mxu0 %v540
    %1304 = vmatpush.msra.mxu0 %v536
    %1305 = vmatpush.msra.mxu0 %v532
    %1306 = vmatpush.msra.mxu0 %v528
    %1307 = vmatpush.msra.mxu0 %v524
    %1308 = vmatpush.msra.mxu0 %v520
    %1309 = vmatpush.msra.mxu0 %v516
    %1310 = vmatpush.msra.mxu0 %v512
    %1311 = vmatpush.msra.mxu0 %v508
    %1312 = vmatpush.msra.mxu0 %v504
    %1313 = vmatpush.msra.mxu0 %v500
    %1314 = vmatpush.msra.mxu0 %v496
    %1315 = vmatpush.msra.mxu0 %v492
    %1316 = vmatpush.msra.mxu0 %v488
    %1317 = vmatpush.msra.mxu0 %v484
    %1318 = vmatpush.msra.mxu0 %v480
    %1319 = vmatmul.f32.gmra.mxu0 %v1298
    %v1320 = vpop.f32.mrf.mxu0
    %v1321 = vadd.f32 0.0, %v1320
    %1322 = vdwg.mxu0
    %1323 = vmatpush.msra.mxu0 %v541
    %1324 = vmatpush.msra.mxu0 %v537
    %1325 = vmatpush.msra.mxu0 %v533
    %1326 = vmatpush.msra.mxu0 %v529
    %1327 = vmatpush.msra.mxu0 %v525
    %1328 = vmatpush.msra.mxu0 %v521
    %1329 = vmatpush.msra.mxu0 %v517
    %1330 = vmatpush.msra.mxu0 %v513
    %1331 = vmatpush.msra.mxu0 %v509
    %1332 = vmatpush.msra.mxu0 %v505
    %1333 = vmatpush.msra.mxu0 %v501
    %1334 = vmatpush.msra.mxu0 %v497
    %1335 = vmatpush.msra.mxu0 %v493
    %1336 = vmatpush.msra.mxu0 %v489
    %1337 = vmatpush.msra.mxu0 %v485
    %1338 = vmatpush.msra.mxu0 %v481
    %1339 = vmatmul.f32.gmra.mxu0 %v1298
    %v1340 = vpop.f32.mrf.mxu0
    %v1341 = vadd.f32 0.0, %v1340
    %1342 = vdwg.mxu0
    %1343 = vmatpush.msra.mxu0 %v542
    %1344 = vmatpush.msra.mxu0 %v538
    %1345 = vmatpush.msra.mxu0 %v534
    %1346 = vmatpush.msra.mxu0 %v530
    %1347 = vmatpush.msra.mxu0 %v526
    %1348 = vmatpush.msra.mxu0 %v522
    %1349 = vmatpush.msra.mxu0 %v518
    %1350 = vmatpush.msra.mxu0 %v514
    %1351 = vmatpush.msra.mxu0 %v510
    %1352 = vmatpush.msra.mxu0 %v506
    %1353 = vmatpush.msra.mxu0 %v502
    %1354 = vmatpush.msra.mxu0 %v498
    %1355 = vmatpush.msra.mxu0 %v494
    %1356 = vmatpush.msra.mxu0 %v490
    %1357 = vmatpush.msra.mxu0 %v486
    %1358 = vmatpush.msra.mxu0 %v482
    %1359 = vmatmul.f32.gmra.mxu0 %v1298
    %v1360 = vpop.f32.mrf.mxu0
    %v1361 = vadd.f32 0.0, %v1360
    %1362 = vdwg.mxu0
    %1363 = vmatpush.msra.mxu0 %v543
    %1364 = vmatpush.msra.mxu0 %v539
    %1365 = vmatpush.msra.mxu0 %v535
    %1366 = vmatpush.msra.mxu0 %v531
    %1367 = vmatpush.msra.mxu0 %v527
    %1368 = vmatpush.msra.mxu0 %v523
    %1369 = vmatpush.msra.mxu0 %v519
    %1370 = vmatpush.msra.mxu0 %v515
    %1371 = vmatpush.msra.mxu0 %v511
    %1372 = vmatpush.msra.mxu0 %v507
    %1373 = vmatpush.msra.mxu0 %v503
    %1374 = vmatpush.msra.mxu0 %v499
    %1375 = vmatpush.msra.mxu0 %v495
    %1376 = vmatpush.msra.mxu0 %v491
    %1377 = vmatpush.msra.mxu0 %v487
    %1378 = vmatpush.msra.mxu0 %v483
    %1379 = vmatmul.f32.gmra.mxu0 %v1298
    %v1380 = vpop.f32.mrf.mxu0
    %v1381 = vadd.f32 0.0, %v1380
    %1382 = vdwg.mxu0
    %v1383 = vadd.f32 %v1299, %v1321
    %v1384 = vadd.f32 %v1300, %v1341
    %v1385 = vadd.f32 %v1301, %v1361
    %v1386 = vadd.f32 %v1302, %v1381
    %v1387 = vxor.u32 %v1383, 2147483648
    %v1388 = vmul.f32 %v1387, 1.442695
    %v1389 = vpow.pop %v1388
    %v1390 = vadd.f32 %v1389, 1.0
    %v1391 = vrcp.pop %v1390
    %v1392 = vmul.f32 %v1390, %v1391
    %v1393 = vsub.f32 1.0, %v1392
    %v1394 = vmul.f32 %v1391, %v1393
    %v1395 = vadd.f32 %v1391, %v1394
    %vm1396 = vweird.f32 %v1390
    %vm1397 = vweird.f32 %v1391
    %vm1398 = vmor %vm1396, %vm1397
    %v1399 = vsel %vm1398, %v1391, %v1395
    %v1400 = vand.u32 2147483647, %v1390
    %vm1401 = vcmp.eq.f32.partialorder %v1400, 8.507059e+37
    %v1402 = vand.u32 %v1390, 2147483648
    %v1403 = vor.u32 1.1754944e-38, %v1402
    %v1404 = vsel %vm1401, %v1403, %v1399
    %v1405 = vmul.f32 1.0, %v1404
    %v1406 = vxor.u32 %v1384, 2147483648
    %v1407 = vmul.f32 %v1406, 1.442695
    %v1408 = vpow.pop %v1407
    %v1409 = vadd.f32 %v1408, 1.0
    %v1410 = vrcp.pop %v1409
    %v1411 = vmul.f32 %v1409, %v1410
    %v1412 = vsub.f32 1.0, %v1411
    %v1413 = vmul.f32 %v1410, %v1412
    %v1414 = vadd.f32 %v1410, %v1413
    %vm1415 = vweird.f32 %v1409
    %vm1416 = vweird.f32 %v1410
    %vm1417 = vmor %vm1415, %vm1416
    %v1418 = vsel %vm1417, %v1410, %v1414
    %v1419 = vand.u32 2147483647, %v1409
    %vm1420 = vcmp.eq.f32.partialorder %v1419, 8.507059e+37
    %v1421 = vand.u32 %v1409, 2147483648
    %v1422 = vor.u32 1.1754944e-38, %v1421
    %v1423 = vsel %vm1420, %v1422, %v1418
    %v1424 = vmul.f32 1.0, %v1423
    %v1425 = vtanh.pop %v1385
    %v1426 = vxor.u32 %v1386, 2147483648
    %v1427 = vmul.f32 %v1426, 1.442695
    %v1428 = vpow.pop %v1427
    %v1429 = vadd.f32 %v1428, 1.0
    %v1430 = vrcp.pop %v1429
    %v1431 = vmul.f32 %v1429, %v1430
    %v1432 = vsub.f32 1.0, %v1431
    %v1433 = vmul.f32 %v1430, %v1432
    %v1434 = vadd.f32 %v1430, %v1433
    %vm1435 = vweird.f32 %v1429
    %vm1436 = vweird.f32 %v1430
    %vm1437 = vmor %vm1435, %vm1436
    %v1438 = vsel %vm1437, %v1430, %v1434
    %v1439 = vand.u32 2147483647, %v1429
    %vm1440 = vcmp.eq.f32.partialorder %v1439, 8.507059e+37
    %v1441 = vand.u32 %v1429, 2147483648
    %v1442 = vor.u32 1.1754944e-38, %v1441
    %v1443 = vsel %vm1440, %v1442, %v1438
    %v1444 = vmul.f32 1.0, %v1443
    %v1445 = vmul.f32 %v1424, %v1296
    %v1446 = vmul.f32 %v1405, %v1425
    %v1447 = vadd.f32 %v1445, %v1446
    %v1448 = vtanh.pop %v1447
    %v1449 = vmul.f32 %v1444, %v1448
    %v1450 = vld [vmem:[#allocation2 + $0xc0] sm:$0xff]
    %v1451 = vld [vmem:[#allocation2 + $0xc8] sm:$0xff]
    %v1452 = vld [vmem:[#allocation2 + $0xd0] sm:$0xff]
    %v1453 = vld [vmem:[#allocation2 + $0xd8] sm:$0xff]
    %1454 = vmatpush.msra.mxu0 %v540
    %1455 = vmatpush.msra.mxu0 %v536
    %1456 = vmatpush.msra.mxu0 %v532
    %1457 = vmatpush.msra.mxu0 %v528
    %1458 = vmatpush.msra.mxu0 %v524
    %1459 = vmatpush.msra.mxu0 %v520
    %1460 = vmatpush.msra.mxu0 %v516
    %1461 = vmatpush.msra.mxu0 %v512
    %1462 = vmatpush.msra.mxu0 %v508
    %1463 = vmatpush.msra.mxu0 %v504
    %1464 = vmatpush.msra.mxu0 %v500
    %1465 = vmatpush.msra.mxu0 %v496
    %1466 = vmatpush.msra.mxu0 %v492
    %1467 = vmatpush.msra.mxu0 %v488
    %1468 = vmatpush.msra.mxu0 %v484
    %1469 = vmatpush.msra.mxu0 %v480
    %1470 = vmatmul.f32.gmra.mxu0 %v1449
    %v1471 = vpop.f32.mrf.mxu0
    %v1472 = vadd.f32 0.0, %v1471
    %1473 = vdwg.mxu0
    %1474 = vmatpush.msra.mxu0 %v541
    %1475 = vmatpush.msra.mxu0 %v537
    %1476 = vmatpush.msra.mxu0 %v533
    %1477 = vmatpush.msra.mxu0 %v529
    %1478 = vmatpush.msra.mxu0 %v525
    %1479 = vmatpush.msra.mxu0 %v521
    %1480 = vmatpush.msra.mxu0 %v517
    %1481 = vmatpush.msra.mxu0 %v513
    %1482 = vmatpush.msra.mxu0 %v509
    %1483 = vmatpush.msra.mxu0 %v505
    %1484 = vmatpush.msra.mxu0 %v501
    %1485 = vmatpush.msra.mxu0 %v497
    %1486 = vmatpush.msra.mxu0 %v493
    %1487 = vmatpush.msra.mxu0 %v489
    %1488 = vmatpush.msra.mxu0 %v485
    %1489 = vmatpush.msra.mxu0 %v481
    %1490 = vmatmul.f32.gmra.mxu0 %v1449
    %v1491 = vpop.f32.mrf.mxu0
    %v1492 = vadd.f32 0.0, %v1491
    %1493 = vdwg.mxu0
    %1494 = vmatpush.msra.mxu0 %v542
    %1495 = vmatpush.msra.mxu0 %v538
    %1496 = vmatpush.msra.mxu0 %v534
    %1497 = vmatpush.msra.mxu0 %v530
    %1498 = vmatpush.msra.mxu0 %v526
    %1499 = vmatpush.msra.mxu0 %v522
    %1500 = vmatpush.msra.mxu0 %v518
    %1501 = vmatpush.msra.mxu0 %v514
    %1502 = vmatpush.msra.mxu0 %v510
    %1503 = vmatpush.msra.mxu0 %v506
    %1504 = vmatpush.msra.mxu0 %v502
    %1505 = vmatpush.msra.mxu0 %v498
    %1506 = vmatpush.msra.mxu0 %v494
    %1507 = vmatpush.msra.mxu0 %v490
    %1508 = vmatpush.msra.mxu0 %v486
    %1509 = vmatpush.msra.mxu0 %v482
    %1510 = vmatmul.f32.gmra.mxu0 %v1449
    %v1511 = vpop.f32.mrf.mxu0
    %v1512 = vadd.f32 0.0, %v1511
    %1513 = vdwg.mxu0
    %1514 = vmatpush.msra.mxu0 %v543
    %1515 = vmatpush.msra.mxu0 %v539
    %1516 = vmatpush.msra.mxu0 %v535
    %1517 = vmatpush.msra.mxu0 %v531
    %1518 = vmatpush.msra.mxu0 %v527
    %1519 = vmatpush.msra.mxu0 %v523
    %1520 = vmatpush.msra.mxu0 %v519
    %1521 = vmatpush.msra.mxu0 %v515
    %1522 = vmatpush.msra.mxu0 %v511
    %1523 = vmatpush.msra.mxu0 %v507
    %1524 = vmatpush.msra.mxu0 %v503
    %1525 = vmatpush.msra.mxu0 %v499
    %1526 = vmatpush.msra.mxu0 %v495
    %1527 = vmatpush.msra.mxu0 %v491
    %1528 = vmatpush.msra.mxu0 %v487
    %1529 = vmatpush.msra.mxu0 %v483
    %1530 = vmatmul.f32.gmra.mxu0 %v1449
    %v1531 = vpop.f32.mrf.mxu0
    %v1532 = vadd.f32 0.0, %v1531
    %1533 = vdwg.mxu0
    %v1534 = vadd.f32 %v1450, %v1472
    %v1535 = vadd.f32 %v1451, %v1492
    %v1536 = vadd.f32 %v1452, %v1512
    %v1537 = vadd.f32 %v1453, %v1532
    %v1538 = vxor.u32 %v1534, 2147483648
    %v1539 = vmul.f32 %v1538, 1.442695
    %v1540 = vpow.pop %v1539
    %v1541 = vadd.f32 %v1540, 1.0
    %v1542 = vrcp.pop %v1541
    %v1543 = vmul.f32 %v1541, %v1542
    %v1544 = vsub.f32 1.0, %v1543
    %v1545 = vmul.f32 %v1542, %v1544
    %v1546 = vadd.f32 %v1542, %v1545
    %vm1547 = vweird.f32 %v1541
    %vm1548 = vweird.f32 %v1542
    %vm1549 = vmor %vm1547, %vm1548
    %v1550 = vsel %vm1549, %v1542, %v1546
    %v1551 = vand.u32 2147483647, %v1541
    %vm1552 = vcmp.eq.f32.partialorder %v1551, 8.507059e+37
    %v1553 = vand.u32 %v1541, 2147483648
    %v1554 = vor.u32 1.1754944e-38, %v1553
    %v1555 = vsel %vm1552, %v1554, %v1550
    %v1556 = vmul.f32 1.0, %v1555
    %v1557 = vxor.u32 %v1535, 2147483648
    %v1558 = vmul.f32 %v1557, 1.442695
    %v1559 = vpow.pop %v1558
    %v1560 = vadd.f32 %v1559, 1.0
    %v1561 = vrcp.pop %v1560
    %v1562 = vmul.f32 %v1560, %v1561
    %v1563 = vsub.f32 1.0, %v1562
    %v1564 = vmul.f32 %v1561, %v1563
    %v1565 = vadd.f32 %v1561, %v1564
    %vm1566 = vweird.f32 %v1560
    %vm1567 = vweird.f32 %v1561
    %vm1568 = vmor %vm1566, %vm1567
    %v1569 = vsel %vm1568, %v1561, %v1565
    %v1570 = vand.u32 2147483647, %v1560
    %vm1571 = vcmp.eq.f32.partialorder %v1570, 8.507059e+37
    %v1572 = vand.u32 %v1560, 2147483648
    %v1573 = vor.u32 1.1754944e-38, %v1572
    %v1574 = vsel %vm1571, %v1573, %v1569
    %v1575 = vmul.f32 1.0, %v1574
    %v1576 = vtanh.pop %v1536
    %v1577 = vxor.u32 %v1537, 2147483648
    %v1578 = vmul.f32 %v1577, 1.442695
    %v1579 = vpow.pop %v1578
    %v1580 = vadd.f32 %v1579, 1.0
    %v1581 = vrcp.pop %v1580
    %v1582 = vmul.f32 %v1580, %v1581
    %v1583 = vsub.f32 1.0, %v1582
    %v1584 = vmul.f32 %v1581, %v1583
    %v1585 = vadd.f32 %v1581, %v1584
    %vm1586 = vweird.f32 %v1580
    %vm1587 = vweird.f32 %v1581
    %vm1588 = vmor %vm1586, %vm1587
    %v1589 = vsel %vm1588, %v1581, %v1585
    %v1590 = vand.u32 2147483647, %v1580
    %vm1591 = vcmp.eq.f32.partialorder %v1590, 8.507059e+37
    %v1592 = vand.u32 %v1580, 2147483648
    %v1593 = vor.u32 1.1754944e-38, %v1592
    %v1594 = vsel %vm1591, %v1593, %v1589
    %v1595 = vmul.f32 1.0, %v1594
    %v1596 = vmul.f32 %v1575, %v1447
    %v1597 = vmul.f32 %v1556, %v1576
    %v1598 = vadd.f32 %v1596, %v1597
    %v1599 = vtanh.pop %v1598
    %v1600 = vmul.f32 %v1595, %v1599
    %v1601 = vld [vmem:[#allocation2 + $0xe0] sm:$0xff]
    %v1602 = vld [vmem:[#allocation2 + $0xe8] sm:$0xff]
    %v1603 = vld [vmem:[#allocation2 + $0xf0] sm:$0xff]
    %v1604 = vld [vmem:[#allocation2 + $0xf8] sm:$0xff]
    %1605 = vmatpush.msra.mxu0 %v540
    %1606 = vmatpush.msra.mxu0 %v536
    %1607 = vmatpush.msra.mxu0 %v532
    %1608 = vmatpush.msra.mxu0 %v528
    %1609 = vmatpush.msra.mxu0 %v524
    %1610 = vmatpush.msra.mxu0 %v520
    %1611 = vmatpush.msra.mxu0 %v516
    %1612 = vmatpush.msra.mxu0 %v512
    %1613 = vmatpush.msra.mxu0 %v508
    %1614 = vmatpush.msra.mxu0 %v504
    %1615 = vmatpush.msra.mxu0 %v500
    %1616 = vmatpush.msra.mxu0 %v496
    %1617 = vmatpush.msra.mxu0 %v492
    %1618 = vmatpush.msra.mxu0 %v488
    %1619 = vmatpush.msra.mxu0 %v484
    %1620 = vmatpush.msra.mxu0 %v480
    %1621 = vmatmul.f32.gmra.mxu0 %v1600
    %v1622 = vpop.f32.mrf.mxu0
    %v1623 = vadd.f32 0.0, %v1622
    %1624 = vdwg.mxu0
    %1625 = vmatpush.msra.mxu0 %v541
    %1626 = vmatpush.msra.mxu0 %v537
    %1627 = vmatpush.msra.mxu0 %v533
    %1628 = vmatpush.msra.mxu0 %v529
    %1629 = vmatpush.msra.mxu0 %v525
    %1630 = vmatpush.msra.mxu0 %v521
    %1631 = vmatpush.msra.mxu0 %v517
    %1632 = vmatpush.msra.mxu0 %v513
    %1633 = vmatpush.msra.mxu0 %v509
    %1634 = vmatpush.msra.mxu0 %v505
    %1635 = vmatpush.msra.mxu0 %v501
    %1636 = vmatpush.msra.mxu0 %v497
    %1637 = vmatpush.msra.mxu0 %v493
    %1638 = vmatpush.msra.mxu0 %v489
    %1639 = vmatpush.msra.mxu0 %v485
    %1640 = vmatpush.msra.mxu0 %v481
    %1641 = vmatmul.f32.gmra.mxu0 %v1600
    %v1642 = vpop.f32.mrf.mxu0
    %v1643 = vadd.f32 0.0, %v1642
    %1644 = vdwg.mxu0
    %1645 = vmatpush.msra.mxu0 %v542
    %1646 = vmatpush.msra.mxu0 %v538
    %1647 = vmatpush.msra.mxu0 %v534
    %1648 = vmatpush.msra.mxu0 %v530
    %1649 = vmatpush.msra.mxu0 %v526
    %1650 = vmatpush.msra.mxu0 %v522
    %1651 = vmatpush.msra.mxu0 %v518
    %1652 = vmatpush.msra.mxu0 %v514
    %1653 = vmatpush.msra.mxu0 %v510
    %1654 = vmatpush.msra.mxu0 %v506
    %1655 = vmatpush.msra.mxu0 %v502
    %1656 = vmatpush.msra.mxu0 %v498
    %1657 = vmatpush.msra.mxu0 %v494
    %1658 = vmatpush.msra.mxu0 %v490
    %1659 = vmatpush.msra.mxu0 %v486
    %1660 = vmatpush.msra.mxu0 %v482
    %1661 = vmatmul.f32.gmra.mxu0 %v1600
    %v1662 = vpop.f32.mrf.mxu0
    %v1663 = vadd.f32 0.0, %v1662
    %1664 = vdwg.mxu0
    %1665 = vmatpush.msra.mxu0 %v543
    %1666 = vmatpush.msra.mxu0 %v539
    %1667 = vmatpush.msra.mxu0 %v535
    %1668 = vmatpush.msra.mxu0 %v531
    %1669 = vmatpush.msra.mxu0 %v527
    %1670 = vmatpush.msra.mxu0 %v523
    %1671 = vmatpush.msra.mxu0 %v519
    %1672 = vmatpush.msra.mxu0 %v515
    %1673 = vmatpush.msra.mxu0 %v511
    %1674 = vmatpush.msra.mxu0 %v507
    %1675 = vmatpush.msra.mxu0 %v503
    %1676 = vmatpush.msra.mxu0 %v499
    %1677 = vmatpush.msra.mxu0 %v495
    %1678 = vmatpush.msra.mxu0 %v491
    %1679 = vmatpush.msra.mxu0 %v487
    %1680 = vmatpush.msra.mxu0 %v483
    %1681 = vmatmul.f32.gmra.mxu0 %v1600
    %v1682 = vpop.f32.mrf.mxu0
    %v1683 = vadd.f32 0.0, %v1682
    %1684 = vdwg.mxu0
    %v1685 = vadd.f32 %v1601, %v1623
    %v1686 = vadd.f32 %v1602, %v1643
    %v1687 = vadd.f32 %v1603, %v1663
    %v1688 = vadd.f32 %v1604, %v1683
    %v1689 = vxor.u32 %v1685, 2147483648
    %v1690 = vmul.f32 %v1689, 1.442695
    %v1691 = vpow.pop %v1690
    %v1692 = vadd.f32 %v1691, 1.0
    %v1693 = vrcp.pop %v1692
    %v1694 = vmul.f32 %v1692, %v1693
    %v1695 = vsub.f32 1.0, %v1694
    %v1696 = vmul.f32 %v1693, %v1695
    %v1697 = vadd.f32 %v1693, %v1696
    %vm1698 = vweird.f32 %v1692
    %vm1699 = vweird.f32 %v1693
    %vm1700 = vmor %vm1698, %vm1699
    %v1701 = vsel %vm1700, %v1693, %v1697
    %v1702 = vand.u32 2147483647, %v1692
    %vm1703 = vcmp.eq.f32.partialorder %v1702, 8.507059e+37
    %v1704 = vand.u32 %v1692, 2147483648
    %v1705 = vor.u32 1.1754944e-38, %v1704
    %v1706 = vsel %vm1703, %v1705, %v1701
    %v1707 = vmul.f32 1.0, %v1706
    %v1708 = vxor.u32 %v1686, 2147483648
    %v1709 = vmul.f32 %v1708, 1.442695
    %v1710 = vpow.pop %v1709
    %v1711 = vadd.f32 %v1710, 1.0
    %v1712 = vrcp.pop %v1711
    %v1713 = vmul.f32 %v1711, %v1712
    %v1714 = vsub.f32 1.0, %v1713
    %v1715 = vmul.f32 %v1712, %v1714
    %v1716 = vadd.f32 %v1712, %v1715
    %vm1717 = vweird.f32 %v1711
    %vm1718 = vweird.f32 %v1712
    %vm1719 = vmor %vm1717, %vm1718
    %v1720 = vsel %vm1719, %v1712, %v1716
    %v1721 = vand.u32 2147483647, %v1711
    %vm1722 = vcmp.eq.f32.partialorder %v1721, 8.507059e+37
    %v1723 = vand.u32 %v1711, 2147483648
    %v1724 = vor.u32 1.1754944e-38, %v1723
    %v1725 = vsel %vm1722, %v1724, %v1720
    %v1726 = vmul.f32 1.0, %v1725
    %v1727 = vtanh.pop %v1687
    %v1728 = vxor.u32 %v1688, 2147483648
    %v1729 = vmul.f32 %v1728, 1.442695
    %v1730 = vpow.pop %v1729
    %v1731 = vadd.f32 %v1730, 1.0
    %v1732 = vrcp.pop %v1731
    %v1733 = vmul.f32 %v1731, %v1732
    %v1734 = vsub.f32 1.0, %v1733
    %v1735 = vmul.f32 %v1732, %v1734
    %v1736 = vadd.f32 %v1732, %v1735
    %vm1737 = vweird.f32 %v1731
    %vm1738 = vweird.f32 %v1732
    %vm1739 = vmor %vm1737, %vm1738
    %v1740 = vsel %vm1739, %v1732, %v1736
    %v1741 = vand.u32 2147483647, %v1731
    %vm1742 = vcmp.eq.f32.partialorder %v1741, 8.507059e+37
    %v1743 = vand.u32 %v1731, 2147483648
    %v1744 = vor.u32 1.1754944e-38, %v1743
    %v1745 = vsel %vm1742, %v1744, %v1740
    %v1746 = vmul.f32 1.0, %v1745
    %v1747 = vmul.f32 %v1726, %v1598
    %v1748 = vmul.f32 %v1707, %v1727
    %v1749 = vadd.f32 %v1747, %v1748
    %v1750 = vtanh.pop %v1749
    %v1751 = vmul.f32 %v1746, %v1750
    %v1752 = vld [vmem:[#allocation8] sm:$0xff]
    %v1753 = vld [vmem:[#allocation8 + $0x8] sm:$0xff]
    %v1754 = vld [vmem:[#allocation8 + $0x10] sm:$0xff]
    %v1755 = vld [vmem:[#allocation8 + $0x18] sm:$0xff]
    %v1756 = vld [vmem:[#allocation8 + $0x20] sm:$0xff]
    %v1757 = vld [vmem:[#allocation8 + $0x28] sm:$0xff]
    %v1758 = vld [vmem:[#allocation8 + $0x30] sm:$0xff]
    %v1759 = vld [vmem:[#allocation8 + $0x38] sm:$0xff]
    %v1760 = vld [vmem:[#allocation8 + $0x40] sm:$0xff]
    %v1761 = vld [vmem:[#allocation8 + $0x48] sm:$0xff]
    %v1762 = vld [vmem:[#allocation8 + $0x50] sm:$0xff]
    %v1763 = vld [vmem:[#allocation8 + $0x58] sm:$0xff]
    %v1764 = vld [vmem:[#allocation8 + $0x60] sm:$0xff]
    %v1765 = vld [vmem:[#allocation8 + $0x68] sm:$0xff]
    %v1766 = vld [vmem:[#allocation8 + $0x70] sm:$0xff]
    %v1767 = vld [vmem:[#allocation8 + $0x78] sm:$0xff]
    %v1768 = vld [vmem:[%s7] sm:$0x1]
    %v1770 = vperm.slane %v1768, 0
    %1772 = vmatpush.msra.mxu0 %v1767
    %1773 = vmatpush.msra.mxu0 %v1766
    %1774 = vmatpush.msra.mxu0 %v1765
    %1775 = vmatpush.msra.mxu0 %v1764
    %1776 = vmatpush.msra.mxu0 %v1763
    %1777 = vmatpush.msra.mxu0 %v1762
    %1778 = vmatpush.msra.mxu0 %v1761
    %1779 = vmatpush.msra.mxu0 %v1760
    %1780 = vmatpush.msra.mxu0 %v1759
    %1781 = vmatpush.msra.mxu0 %v1758
    %1782 = vmatpush.msra.mxu0 %v1757
    %1783 = vmatpush.msra.mxu0 %v1756
    %1784 = vmatpush.msra.mxu0 %v1755
    %1785 = vmatpush.msra.mxu0 %v1754
    %1786 = vmatpush.msra.mxu0 %v1753
    %1787 = vmatpush.msra.mxu0 %v1752
    %1788 = vmatmul.f32.gmra.mxu0 %v1751
    %v1789 = vpop.f32.mrf.mxu0
    %v1790 = vadd.f32 %v1770, %v1789
    %1791 = vdwg.mxu0
    %v1792 = vmax.f32 %v1790, 0.0
    %v1793 = vld [vmem:[#allocation9] sm:$0xff]
    %v1794 = vld [vmem:[#allocation9 + $0x8] sm:$0xff]
    %v1795 = vld [vmem:[#allocation9 + $0x10] sm:$0xff]
    %v1796 = vld [vmem:[#allocation9 + $0x18] sm:$0xff]
    %v1797 = vld [vmem:[#allocation9 + $0x20] sm:$0xff]
    %v1798 = vld [vmem:[#allocation9 + $0x28] sm:$0xff]
    %v1799 = vld [vmem:[#allocation9 + $0x30] sm:$0xff]
    %v1800 = vld [vmem:[#allocation9 + $0x38] sm:$0xff]
    %v1801 = vld [vmem:[#allocation9 + $0x40] sm:$0xff]
    %v1802 = vld [vmem:[#allocation9 + $0x48] sm:$0xff]
    %v1803 = vld [vmem:[#allocation9 + $0x50] sm:$0xff]
    %v1804 = vld [vmem:[#allocation9 + $0x58] sm:$0xff]
    %v1805 = vld [vmem:[#allocation9 + $0x60] sm:$0xff]
    %v1806 = vld [vmem:[#allocation9 + $0x68] sm:$0xff]
    %v1807 = vld [vmem:[#allocation9 + $0x70] sm:$0xff]
    %v1808 = vld [vmem:[#allocation9 + $0x78] sm:$0xff]
    %v1809 = vld [vmem:[%s9] sm:$0x1]
    %v1811 = vperm.slane %v1809, 0
    %1813 = vmatpush.msra.mxu0 %v1808
    %1814 = vmatpush.msra.mxu0 %v1807
    %1815 = vmatpush.msra.mxu0 %v1806
    %1816 = vmatpush.msra.mxu0 %v1805
    %1817 = vmatpush.msra.mxu0 %v1804
    %1818 = vmatpush.msra.mxu0 %v1803
    %1819 = vmatpush.msra.mxu0 %v1802
    %1820 = vmatpush.msra.mxu0 %v1801
    %1821 = vmatpush.msra.mxu0 %v1800
    %1822 = vmatpush.msra.mxu0 %v1799
    %1823 = vmatpush.msra.mxu0 %v1798
    %1824 = vmatpush.msra.mxu0 %v1797
    %1825 = vmatpush.msra.mxu0 %v1796
    %1826 = vmatpush.msra.mxu0 %v1795
    %1827 = vmatpush.msra.mxu0 %v1794
    %1828 = vmatpush.msra.mxu0 %v1793
    %1829 = vmatmul.f32.gmra.mxu0 %v1792
    %v1830 = vpop.f32.mrf.mxu0
    %v1831 = vadd.f32 %v1811, %v1830
    %1832 = vdwg.mxu0
    %v1833 = vld [vmem:[#allocation11] sm:$0xff]
    %v1834 = vld [vmem:[#allocation11 + $0x8] sm:$0xff]
    %v1835 = vld [vmem:[#allocation11 + $0x10] sm:$0xff]
    %v1836 = vld [vmem:[#allocation11 + $0x18] sm:$0xff]
    %v1837 = vld [vmem:[#allocation11 + $0x20] sm:$0xff]
    %v1838 = vld [vmem:[#allocation11 + $0x28] sm:$0xff]
    %v1839 = vld [vmem:[#allocation11 + $0x30] sm:$0xff]
    %v1840 = vld [vmem:[#allocation11 + $0x38] sm:$0xff]
    %v1841 = vld [vmem:[#allocation11 + $0x40] sm:$0xff]
    %v1842 = vld [vmem:[#allocation11 + $0x48] sm:$0xff]
    %v1843 = vld [vmem:[#allocation11 + $0x50] sm:$0xff]
    %v1844 = vld [vmem:[#allocation11 + $0x58] sm:$0xff]
    %v1845 = vld [vmem:[#allocation11 + $0x60] sm:$0xff]
    %v1846 = vld [vmem:[#allocation11 + $0x68] sm:$0xff]
    %v1847 = vld [vmem:[#allocation11 + $0x70] sm:$0xff]
    %v1848 = vld [vmem:[#allocation11 + $0x78] sm:$0xff]
    %v1849 = vld [vmem:[%s11] sm:$0x1]
    %v1851 = vperm.slane %v1849, 0
    %1853 = vmatpush.msra.mxu0 %v1848
    %1854 = vmatpush.msra.mxu0 %v1847
    %1855 = vmatpush.msra.mxu0 %v1846
    %1856 = vmatpush.msra.mxu0 %v1845
    %1857 = vmatpush.msra.mxu0 %v1844
    %1858 = vmatpush.msra.mxu0 %v1843
    %1859 = vmatpush.msra.mxu0 %v1842
    %1860 = vmatpush.msra.mxu0 %v1841
    %1861 = vmatpush.msra.mxu0 %v1840
    %1862 = vmatpush.msra.mxu0 %v1839
    %1863 = vmatpush.msra.mxu0 %v1838
    %1864 = vmatpush.msra.mxu0 %v1837
    %1865 = vmatpush.msra.mxu0 %v1836
    %1866 = vmatpush.msra.mxu0 %v1835
    %1867 = vmatpush.msra.mxu0 %v1834
    %1868 = vmatpush.msra.mxu0 %v1833
    %1869 = vmatmul.f32.gmra.mxu0 %v1792
    %v1870 = vpop.f32.mrf.mxu0
    %v1871 = vadd.f32 %v1851, %v1870
    %1872 = vdwg.mxu0
    %v1873 = vmax.f32 %v1871, -20.0
    %v1874 = vmin.f32 %v1873, 0.0
    %v1875 = vmul.f32 %v1874, 1.442695
    %v1876 = vpow.pop %v1875
    %v1877 = vld [vmem:[%s12] sm:$0xff]
    %v1878 = vmul.f32 %v1876, %v1877
    %v1879 = vadd.f32 %v1831, %v1878
    %1880 = vst [vmem:[#allocation12] sm:$0xff] %v1879
    %1881 = vst [vmem:[#allocation13] sm:$0xff] %v1831
    %1882 = vst [vmem:[#allocation15] sm:$0xff] %v1876
    // Predicated region
    $region74: #{tpu_custom_call.1} parent=1 // pred_check
      _
    $region75: #{tpu_custom_call.1} parent=1 // pred_check_branch
      %1884 = sbr.rel (0) target = $region77
    $region76: #{tpu_custom_call.1} parent=1 // pred_region
      %1886 = vsyncadd [#allocation5], 0
      %s1888 = sshll.u32 [#allocation12], 4
      %s1889 = int_to_ptr.vmem [resolvable:$true] %s1888
      %s1890 = sshll.u32 %s13, 4
      %s1891 = int_to_ptr.hbm [resolvable:$true] %s1890
      %1893 = dma.vmem_to_hbm [thread:$0]  %s1889, 128, %s1891, [#allocation5]
    $region77: #{tpu_custom_call.1} parent=1 // pred_fallthru
      _
    // Predicated region
    $region78: #{tpu_custom_call.1} parent=1 // pred_check
      _
    $region79: #{tpu_custom_call.1} parent=1 // pred_check_branch
      %1895 = sbr.rel (0) target = $region81
    $region80: #{tpu_custom_call.1} parent=1 // pred_region
      %1897 = vsyncadd [#allocation14], 0
      %s1899 = sshll.u32 [#allocation13], 4
      %s1900 = int_to_ptr.vmem [resolvable:$true] %s1899
      %s1901 = sshll.u32 %s14, 4
      %s1902 = int_to_ptr.hbm [resolvable:$true] %s1901
      %1904 = dma.vmem_to_hbm [thread:$0]  %s1900, 128, %s1902, [#allocation14]
    $region81: #{tpu_custom_call.1} parent=1 // pred_fallthru
      _
    // Predicated region
    $region82: #{tpu_custom_call.1} parent=1 // pred_check
      _
    $region83: #{tpu_custom_call.1} parent=1 // pred_check_branch
      %1906 = sbr.rel (0) target = $region85
    $region84: #{tpu_custom_call.1} parent=1 // pred_region
      %1908 = vsyncadd [#allocation14], 0
      %s1910 = sshll.u32 [#allocation15], 4
      %s1911 = int_to_ptr.vmem [resolvable:$true] %s1910
      %s1912 = sshll.u32 %s15, 4
      %s1913 = int_to_ptr.hbm [resolvable:$true] %s1912
      %1915 = dma.vmem_to_hbm [thread:$0]  %s1911, 128, %s1913, [#allocation14]
    $region85: #{tpu_custom_call.1} parent=1 // pred_fallthru
      _
    // Predicated region
    $region86: #{tpu_custom_call.1} parent=1 // pred_check
      _
    $region87: #{tpu_custom_call.1} parent=1 // pred_check_branch
      %1917 = sbr.rel (0) target = $region89
    $region88: #{tpu_custom_call.1} parent=1 // pred_region
      %1919 = dma.done [#allocation5], 128
    $region89: #{tpu_custom_call.1} parent=1 // pred_fallthru
      _
    // Predicated region
    $region90: #{tpu_custom_call.1} parent=1 // pred_check
      _
    $region91: #{tpu_custom_call.1} parent=1 // pred_check_branch
      %1921 = sbr.rel (0) target = $region93
    $region92: #{tpu_custom_call.1} parent=1 // pred_region
      %1923 = dma.done [#allocation14], 128
    $region93: #{tpu_custom_call.1} parent=1 // pred_fallthru
      _
    // Predicated region
    $region94: #{tpu_custom_call.1} parent=1 // pred_check
      _
    $region95: #{tpu_custom_call.1} parent=1 // pred_check_branch
      %1925 = sbr.rel (0) target = $region97
    $region96: #{tpu_custom_call.1} parent=1 // pred_region
      %1927 = dma.done [#allocation14], 128
    $region97: #{tpu_custom_call.1} parent=1 // pred_fallthru
      _
    %1928 = vsyncpa [#allocation4], 1
    %1929 = vsyncpa [#allocation7], 1
    %1930 = vsyncpa [#allocation10], 1
    %1931 = vsyncpa [#allocation5], 1
    %1932 = vsyncpa [#allocation14], 1

</llo_original>
